<compile_context>
chip_gen: v7x
topology: tpu7x:2x2x1
jax: 0.10.0
libtpu: 0.0.40
codegen_flags: <defaults>
</compile_context>

<pallas_src>
import functools

import jax
import jax.numpy as jnp
import numpy as np
from jax.experimental import pallas as pl
from jax.experimental.pallas import tpu as pltpu


def _bottconv_kernel(x_ref, w1_ref, b1_ref, w2s_ref, o_ref, ypad_ref,
                     *, K, pad, H, W):
    # x_ref:   (1, Cin, HW)        w1_ref: (Cmid, Cin)     b1_ref: (Cmid, 1)
    # w2s_ref: (K*K, Cout, Cmid)   o_ref:  (1, Cout, HW)
    # ypad_ref (scratch): (Cmid, HW + 2*maxoff) flat zero-padded line buffer
    HW = H * W
    maxoff = pad * W + pad
    Cmid = ypad_ref.shape[0]
    Cout = o_ref.shape[1]

    x = x_ref[0]                                          # (Cin, HW)

    # ---- pointwise_1: 1x1 conv == (Cmid, Cin) @ (Cin, HW) + bias -----------
    y1 = jnp.dot(w1_ref[...], x, preferred_element_type=jnp.float32)
    y1 = y1 + b1_ref[...]                                 # broadcast (Cmid, 1)

    # Flat zero-padded line buffer: out-of-range rows of a shifted tap land in
    # the zero borders; only column wraparound needs explicit masking below.
    if maxoff > 0:
        zero_strip = jnp.zeros((Cmid, maxoff), jnp.float32)
        ypad_ref[:, :maxoff] = zero_strip
        ypad_ref[:, maxoff + HW:] = zero_strip
    ypad_ref[:, maxoff:maxoff + HW] = y1

    # ---- fused depthwise KxK + pointwise_2: K*K accumulated MXU matmuls ----
    if K > 1:
        col = jax.lax.broadcasted_iota(jnp.int32, (1, HW), 1) % W   # (1, HW)
    acc = jnp.zeros((Cout, HW), jnp.float32)
    for ki in range(K):
        for kj in range(K):
            dy, dx = ki - pad, kj - pad
            start = maxoff + dy * W + dx
            tap = ypad_ref[:, start:start + HW]           # (Cmid, HW) static slice
            if dx != 0:                                   # mask column wraparound
                ok = (col >= -dx) & (col < W - dx)
                tap = jnp.where(ok, tap, 0.0)
            acc = acc + jnp.dot(w2s_ref[ki * K + kj], tap,
                                preferred_element_type=jnp.float32)

    o_ref[0] = acc.astype(o_ref.dtype)


def bott_conv_pallas(x_nchw, w1, b1, w2s, *, kernel_size, padding):
    """x_nchw: (N, Cin, H, W). w1: (Cmid, Cin), b1: (Cmid, 1),
    w2s: (K*K, Cout, Cmid) pre-scaled pointwise_2 weights
    (w2s[ki*K+kj, o, c] = pw2[o, c] * dw[c, ki, kj]). Returns (N, Cout, H, W)."""
    N, Cin, H, W = x_nchw.shape
    Cmid = w1.shape[0]
    Cout = w2s.shape[1]
    K, pad = kernel_size, padding
    assert 2 * pad == K - 1, "only stride=1 / same-size output supported"
    HW = H * W
    maxoff = pad * W + pad

    x_flat = x_nchw.reshape(N, Cin, HW)

    kernel = functools.partial(_bottconv_kernel, K=K, pad=pad, H=H, W=W)

    flops = 2 * N * HW * (Cmid * Cin + K * K * Cout * Cmid)
    bytes_accessed = 4 * (N * Cin * HW + N * Cout * HW
                          + Cmid * Cin + Cmid + K * K * Cout * Cmid)
    # Per-step VMEM residency: double-buffered in/out tiles + scratch + weights.
    step_bytes = 4 * (2 * Cin * HW + 2 * Cout * HW
                      + Cmid * (HW + 2 * maxoff)
                      + Cmid * Cin + Cmid + K * K * Cout * Cmid)
    vmem_limit = int(min(96 * 1024 * 1024, max(4 * 1024 * 1024, 4 * step_bytes)))

    out_flat = pl.pallas_call(
        kernel,
        out_shape=jax.ShapeDtypeStruct((N, Cout, HW), x_nchw.dtype),
        grid_spec=pltpu.PrefetchScalarGridSpec(
            num_scalar_prefetch=0,
            grid=(N,),
            in_specs=[
                pl.BlockSpec((1, Cin, HW), lambda n: (n, 0, 0)),
                pl.BlockSpec((Cmid, Cin), lambda n: (0, 0)),
                pl.BlockSpec((Cmid, 1), lambda n: (0, 0)),
                pl.BlockSpec((K * K, Cout, Cmid), lambda n: (0, 0, 0)),
            ],
            out_specs=pl.BlockSpec((1, Cout, HW), lambda n: (n, 0, 0)),
            scratch_shapes=[
                pltpu.VMEM((Cmid, HW + 2 * maxoff), jnp.float32),
            ],
        ),
        compiler_params=pltpu.CompilerParams(
            dimension_semantics=("parallel",),
            vmem_limit_bytes=vmem_limit),
        cost_estimate=pl.CostEstimate(flops=flops, transcendentals=0,
                                      bytes_accessed=bytes_accessed),
    )(x_flat, w1, b1, w2s)

    return out_flat.reshape(N, Cout, H, W)


def make_kernel_params(pw1_oihw, b1, dw_oihw, pw2_oihw):
    """Convert torch-layout (OIHW) BottConv params to kernel layout."""
    Cmid, Cin = pw1_oihw.shape[0], pw1_oihw.shape[1]
    K = dw_oihw.shape[2]
    w1 = pw1_oihw[:, :, 0, 0]                               # (Cmid, Cin)
    b1_k = b1.reshape(Cmid, 1)                              # (Cmid, 1)
    pw2_mat = pw2_oihw[:, :, 0, 0]                          # (Cout, Cmid)
    dw_taps = dw_oihw[:, 0].reshape(Cmid, K * K)            # (Cmid, K*K)
    # w2s[t, o, c] = pw2[o, c] * dw[c, tap t]  -> fuses depthwise with pw2.
    w2s = pw2_mat[None, :, :] * jnp.transpose(dw_taps)[:, None, :]
    return w1, b1_k, w2s


def bott_conv_ref(x_nchw, pw1_oihw, b1, dw_oihw, pw2_oihw, *, padding):
    """Pure-JAX reference mirroring the torch module (NCHW / OIHW)."""
    Cmid = dw_oihw.shape[0]
    dn = ("NCHW", "OIHW", "NCHW")
    y = jax.lax.conv_general_dilated(x_nchw, pw1_oihw, (1, 1), "VALID",
                                     dimension_numbers=dn)
    y = y + b1[None, :, None, None]
    y = jax.lax.conv_general_dilated(y, dw_oihw, (1, 1),
                                     [(padding, padding), (padding, padding)],
                                     feature_group_count=Cmid,
                                     dimension_numbers=dn)
    y = jax.lax.conv_general_dilated(y, pw2_oihw, (1, 1), "VALID",
                                     dimension_numbers=dn)
    return y


if __name__ == "__main__":
    # Module config: BottConv(in=4, out=8, mid=4, kernel_size=3, stride=1,
    #                          padding=1, bias=True)
    N, Cin, Cmid, Cout = 2, 4, 4, 8
    H = W = 16
    K, pad = 3, 1

    key = jax.random.PRNGKey(0)
    kx, k1, kb, kd, k2 = jax.random.split(key, 5)

    x = jax.random.normal(kx, (N, Cin, H, W), jnp.float32)

    # Deterministic "torch-layout" parameters (OIHW).
    pw1_oihw = 0.1 * jax.random.normal(k1, (Cmid, Cin, 1, 1), jnp.float32)
    b1 = 0.1 * jax.random.normal(kb, (Cmid,), jnp.float32)
    dw_oihw = 0.1 * jax.random.normal(kd, (Cmid, 1, K, K), jnp.float32)
    pw2_oihw = 0.1 * jax.random.normal(k2, (Cout, Cmid, 1, 1), jnp.float32)

    # Kernel-layout (pre-fused) params.
    w1, b1_k, w2s = make_kernel_params(pw1_oihw, b1, dw_oihw, pw2_oihw)

    out = bott_conv_pallas(x, w1, b1_k, w2s, kernel_size=K, padding=pad)
    out = jax.block_until_ready(out)

    ref = bott_conv_ref(x, pw1_oihw, b1, dw_oihw, pw2_oihw, padding=pad)
    np.testing.assert_allclose(np.asarray(out), np.asarray(ref),
                               rtol=1e-4, atol=1e-4)
    print("KERNEL_OK")
</pallas_src>

<mosaic_0001>
module attributes {stable_mosaic.version = 11 : i64} {
  func.func @_bottconv_kernel(%arg0: i32, %arg1: memref<1x4x256xf32, #tpu.memory_space<vmem>>, %arg2: memref<4x4xf32, #tpu.memory_space<vmem>>, %arg3: memref<4x1xf32, #tpu.memory_space<vmem>>, %arg4: memref<9x8x4xf32, #tpu.memory_space<vmem>>, %arg5: memref<1x8x256xf32, #tpu.memory_space<vmem>>, %arg6: memref<4x290xf32, #tpu.memory_space<vmem>>) attributes {dimension_semantics = [#tpu.dimension_semantics<parallel>], iteration_bounds = array<i64: 2>, scalar_prefetch = 0 : i64, scratch_operands = 1 : i64, tpu.core_type = #tpu.core_type<tc>, window_params = [{transform_indices = @transform_0, window_bounds = array<i64: 1, 4, 256>}, {pipeline_mode = #tpu.pipeline_mode<synchronous>, transform_indices = @transform_1, window_bounds = array<i64: 4, 4>}, {pipeline_mode = #tpu.pipeline_mode<synchronous>, transform_indices = @transform_2, window_bounds = array<i64: 4, 1>}, {pipeline_mode = #tpu.pipeline_mode<synchronous>, transform_indices = @transform_3, window_bounds = array<i64: 9, 8, 4>}, {transform_indices = @transform_4, window_bounds = array<i64: 1, 8, 256>}]} {
    %c0 = arith.constant 0 : index
    %c0_0 = arith.constant 0 : index
    %c0_1 = arith.constant 0 : index
    %0 = vector.load %arg1[%c0, %c0_0, %c0_1] : memref<1x4x256xf32, #tpu.memory_space<vmem>>, vector<1x4x256xf32>
    %1 = vector.shape_cast %0 : vector<1x4x256xf32> to vector<4x256xf32>
    %c0_2 = arith.constant 0 : index
    %c0_3 = arith.constant 0 : index
    %2 = vector.load %arg2[%c0_2, %c0_3] : memref<4x4xf32, #tpu.memory_space<vmem>>, vector<4x4xf32>
    %cst = arith.constant dense<0.000000e+00> : vector<4x256xf32>
    %3 = tpu.matmul %2, %1, %cst {dimension_numbers = #tpu.dot_dimension_numbers<[1], [0], [0], [1], [0, 0, 1, 1], [], []>} : vector<4x4xf32>, vector<4x256xf32>, vector<4x256xf32> -> vector<4x256xf32>
    %c0_4 = arith.constant 0 : index
    %c0_5 = arith.constant 0 : index
    %4 = vector.load %arg3[%c0_4, %c0_5] : memref<4x1xf32, #tpu.memory_space<vmem>>, vector<4x1xf32>
    %5 = vector.broadcast %4 : vector<4x1xf32> to vector<4x256xf32>
    %6 = arith.addf %3, %5 : vector<4x256xf32>
    %cst_6 = arith.constant 0.000000e+00 : f32
    %7 = vector.broadcast %cst_6 : f32 to vector<4x17xf32>
    %c0_7 = arith.constant 0 : index
    %c0_8 = arith.constant 0 : index
    %8 = vector.load %arg6[%c0_7, %c0_8] : memref<4x290xf32, #tpu.memory_space<vmem>>, vector<4x17xf32>
    tpu.vector_store %arg6[%c0_7, %c0_8], %7 {strides = array<i32>} : memref<4x290xf32, #tpu.memory_space<vmem>>, vector<4x17xf32>,
    %c0_9 = arith.constant 0 : index
    %c273 = arith.constant 273 : index
    %9 = vector.load %arg6[%c0_9, %c273] : memref<4x290xf32, #tpu.memory_space<vmem>>, vector<4x17xf32>
    tpu.vector_store %arg6[%c0_9, %c273], %7 {strides = array<i32>} : memref<4x290xf32, #tpu.memory_space<vmem>>, vector<4x17xf32>,
    %c0_10 = arith.constant 0 : index
    %c17 = arith.constant 17 : index
    %10 = vector.load %arg6[%c0_10, %c17] : memref<4x290xf32, #tpu.memory_space<vmem>>, vector<4x256xf32>
    tpu.vector_store %arg6[%c0_10, %c17], %6 {strides = array<i32>} : memref<4x290xf32, #tpu.memory_space<vmem>>, vector<4x256xf32>,
    %11 = tpu.iota {dimensions = array<i32: 1>} : vector<1x256xi32>
    %c16_i32 = arith.constant 16 : i32
    %c0_i32 = arith.constant 0 : i32
    %12 = arith.cmpi eq, %c16_i32, %c0_i32 : i32
    %c1_i32 = arith.constant 1 : i32
    %13 = arith.select %12, %c1_i32, %c16_i32 : i32
    %14 = vector.broadcast %13 : i32 to vector<1x256xi32>
    %15 = arith.remsi %11, %14 : vector<1x256xi32>
    %c0_i32_11 = arith.constant 0 : i32
    %16 = vector.broadcast %c0_i32_11 : i32 to vector<1x256xi32>
    %17 = arith.cmpi ne, %15, %16 : vector<1x256xi32>
    %c0_i32_12 = arith.constant 0 : i32
    %18 = vector.broadcast %c0_i32_12 : i32 to vector<1x256xi32>
    %19 = arith.cmpi slt, %15, %18 : vector<1x256xi32>
    %c0_i32_13 = arith.constant 0 : i32
    %20 = arith.cmpi slt, %13, %c0_i32_13 : i32
    %21 = vector.broadcast %20 : i1 to vector<1x256xi1>
    %22 = vector.broadcast %21 : vector<1x256xi1> to vector<1x256xi1>
    %23 = arith.xori %19, %22 : vector<1x256xi1>
    %24 = arith.andi %23, %17 : vector<1x256xi1>
    %25 = vector.broadcast %13 : i32 to vector<1x256xi32>
    %26 = arith.addi %15, %25 : vector<1x256xi32>
    %27 = arith.select %24, %26, %15 : vector<1x256xi1>, vector<1x256xi32>
    %cst_14 = arith.constant 0.000000e+00 : f32
    %28 = vector.broadcast %cst_14 : f32 to vector<8x256xf32>
    %c0_15 = arith.constant 0 : index
    %c0_16 = arith.constant 0 : index
    %29 = vector.load %arg6[%c0_15, %c0_16] : memref<4x290xf32, #tpu.memory_space<vmem>>, vector<4x256xf32>
    %c1_i32_17 = arith.constant 1 : i32
    %30 = vector.broadcast %c1_i32_17 : i32 to vector<1x256xi32>
    %31 = arith.cmpi sge, %27, %30 : vector<1x256xi32>
    %c17_i32 = arith.constant 17 : i32
    %32 = vector.broadcast %c17_i32 : i32 to vector<1x256xi32>
    %33 = arith.cmpi slt, %27, %32 : vector<1x256xi32>
    %34 = arith.andi %31, %33 : vector<1x256xi1>
    %cst_18 = arith.constant 0.000000e+00 : f32
    %35 = vector.shape_cast %34 : vector<1x256xi1> to vector<1x256xi1>
    %36 = vector.broadcast %35 : vector<1x256xi1> to vector<4x256xi1>
    %37 = vector.broadcast %cst_18 : f32 to vector<4x256xf32>
    %38 = arith.select %36, %29, %37 : vector<4x256xi1>, vector<4x256xf32>
    %c0_19 = arith.constant 0 : index
    %c0_20 = arith.constant 0 : index
    %c0_21 = arith.constant 0 : index
    %39 = vector.load %arg4[%c0_19, %c0_20, %c0_21] : memref<9x8x4xf32, #tpu.memory_space<vmem>>, vector<1x8x4xf32>
    %40 = vector.shape_cast %39 : vector<1x8x4xf32> to vector<8x4xf32>
    %cst_22 = arith.constant dense<0.000000e+00> : vector<8x256xf32>
    %41 = tpu.matmul %40, %38, %cst_22 {dimension_numbers = #tpu.dot_dimension_numbers<[1], [0], [0], [1], [0, 0, 1, 1], [], []>} : vector<8x4xf32>, vector<4x256xf32>, vector<8x256xf32> -> vector<8x256xf32>
    %42 = arith.addf %28, %41 : vector<8x256xf32>
    %c0_23 = arith.constant 0 : index
    %c1 = arith.constant 1 : index
    %43 = vector.load %arg6[%c0_23, %c1] : memref<4x290xf32, #tpu.memory_space<vmem>>, vector<4x256xf32>
    %c1_24 = arith.constant 1 : index
    %c0_25 = arith.constant 0 : index
    %c0_26 = arith.constant 0 : index
    %44 = vector.load %arg4[%c1_24, %c0_25, %c0_26] : memref<9x8x4xf32, #tpu.memory_space<vmem>>, vector<1x8x4xf32>
    %45 = vector.shape_cast %44 : vector<1x8x4xf32> to vector<8x4xf32>
    %cst_27 = arith.constant dense<0.000000e+00> : vector<8x256xf32>
    %46 = tpu.matmul %45, %43, %cst_27 {dimension_numbers = #tpu.dot_dimension_numbers<[1], [0], [0], [1], [0, 0, 1, 1], [], []>} : vector<8x4xf32>, vector<4x256xf32>, vector<8x256xf32> -> vector<8x256xf32>
    %47 = arith.addf %42, %46 : vector<8x256xf32>
    %c0_28 = arith.constant 0 : index
    %c2 = arith.constant 2 : index
    %48 = vector.load %arg6[%c0_28, %c2] : memref<4x290xf32, #tpu.memory_space<vmem>>, vector<4x256xf32>
    %c-1_i32 = arith.constant -1 : i32
    %49 = vector.broadcast %c-1_i32 : i32 to vector<1x256xi32>
    %50 = arith.cmpi sge, %27, %49 : vector<1x256xi32>
    %c15_i32 = arith.constant 15 : i32
    %51 = vector.broadcast %c15_i32 : i32 to vector<1x256xi32>
    %52 = arith.cmpi slt, %27, %51 : vector<1x256xi32>
    %53 = arith.andi %50, %52 : vector<1x256xi1>
    %cst_29 = arith.constant 0.000000e+00 : f32
    %54 = vector.shape_cast %53 : vector<1x256xi1> to vector<1x256xi1>
    %55 = vector.broadcast %54 : vector<1x256xi1> to vector<4x256xi1>
    %56 = vector.broadcast %cst_29 : f32 to vector<4x256xf32>
    %57 = arith.select %55, %48, %56 : vector<4x256xi1>, vector<4x256xf32>
    %c2_30 = arith.constant 2 : index
    %c0_31 = arith.constant 0 : index
    %c0_32 = arith.constant 0 : index
    %58 = vector.load %arg4[%c2_30, %c0_31, %c0_32] : memref<9x8x4xf32, #tpu.memory_space<vmem>>, vector<1x8x4xf32>
    %59 = vector.shape_cast %58 : vector<1x8x4xf32> to vector<8x4xf32>
    %cst_33 = arith.constant dense<0.000000e+00> : vector<8x256xf32>
    %60 = tpu.matmul %59, %57, %cst_33 {dimension_numbers = #tpu.dot_dimension_numbers<[1], [0], [0], [1], [0, 0, 1, 1], [], []>} : vector<8x4xf32>, vector<4x256xf32>, vector<8x256xf32> -> vector<8x256xf32>
    %61 = arith.addf %47, %60 : vector<8x256xf32>
    %c0_34 = arith.constant 0 : index
    %c16 = arith.constant 16 : index
    %62 = vector.load %arg6[%c0_34, %c16] : memref<4x290xf32, #tpu.memory_space<vmem>>, vector<4x256xf32>
    %c1_i32_35 = arith.constant 1 : i32
    %63 = vector.broadcast %c1_i32_35 : i32 to vector<1x256xi32>
    %64 = arith.cmpi sge, %27, %63 : vector<1x256xi32>
    %c17_i32_36 = arith.constant 17 : i32
    %65 = vector.broadcast %c17_i32_36 : i32 to vector<1x256xi32>
    %66 = arith.cmpi slt, %27, %65 : vector<1x256xi32>
    %67 = arith.andi %64, %66 : vector<1x256xi1>
    %cst_37 = arith.constant 0.000000e+00 : f32
    %68 = vector.shape_cast %67 : vector<1x256xi1> to vector<1x256xi1>
    %69 = vector.broadcast %68 : vector<1x256xi1> to vector<4x256xi1>
    %70 = vector.broadcast %cst_37 : f32 to vector<4x256xf32>
    %71 = arith.select %69, %62, %70 : vector<4x256xi1>, vector<4x256xf32>
    %c3 = arith.constant 3 : index
    %c0_38 = arith.constant 0 : index
    %c0_39 = arith.constant 0 : index
    %72 = vector.load %arg4[%c3, %c0_38, %c0_39] : memref<9x8x4xf32, #tpu.memory_space<vmem>>, vector<1x8x4xf32>
    %73 = vector.shape_cast %72 : vector<1x8x4xf32> to vector<8x4xf32>
    %cst_40 = arith.constant dense<0.000000e+00> : vector<8x256xf32>
    %74 = tpu.matmul %73, %71, %cst_40 {dimension_numbers = #tpu.dot_dimension_numbers<[1], [0], [0], [1], [0, 0, 1, 1], [], []>} : vector<8x4xf32>, vector<4x256xf32>, vector<8x256xf32> -> vector<8x256xf32>
    %75 = arith.addf %61, %74 : vector<8x256xf32>
    %c0_41 = arith.constant 0 : index
    %c17_42 = arith.constant 17 : index
    %76 = vector.load %arg6[%c0_41, %c17_42] : memref<4x290xf32, #tpu.memory_space<vmem>>, vector<4x256xf32>
    %c4 = arith.constant 4 : index
    %c0_43 = arith.constant 0 : index
    %c0_44 = arith.constant 0 : index
    %77 = vector.load %arg4[%c4, %c0_43, %c0_44] : memref<9x8x4xf32, #tpu.memory_space<vmem>>, vector<1x8x4xf32>
    %78 = vector.shape_cast %77 : vector<1x8x4xf32> to vector<8x4xf32>
    %cst_45 = arith.constant dense<0.000000e+00> : vector<8x256xf32>
    %79 = tpu.matmul %78, %76, %cst_45 {dimension_numbers = #tpu.dot_dimension_numbers<[1], [0], [0], [1], [0, 0, 1, 1], [], []>} : vector<8x4xf32>, vector<4x256xf32>, vector<8x256xf32> -> vector<8x256xf32>
    %80 = arith.addf %75, %79 : vector<8x256xf32>
    %c0_46 = arith.constant 0 : index
    %c18 = arith.constant 18 : index
    %81 = vector.load %arg6[%c0_46, %c18] : memref<4x290xf32, #tpu.memory_space<vmem>>, vector<4x256xf32>
    %c-1_i32_47 = arith.constant -1 : i32
    %82 = vector.broadcast %c-1_i32_47 : i32 to vector<1x256xi32>
    %83 = arith.cmpi sge, %27, %82 : vector<1x256xi32>
    %c15_i32_48 = arith.constant 15 : i32
    %84 = vector.broadcast %c15_i32_48 : i32 to vector<1x256xi32>
    %85 = arith.cmpi slt, %27, %84 : vector<1x256xi32>
    %86 = arith.andi %83, %85 : vector<1x256xi1>
    %cst_49 = arith.constant 0.000000e+00 : f32
    %87 = vector.shape_cast %86 : vector<1x256xi1> to vector<1x256xi1>
    %88 = vector.broadcast %87 : vector<1x256xi1> to vector<4x256xi1>
    %89 = vector.broadcast %cst_49 : f32 to vector<4x256xf32>
    %90 = arith.select %88, %81, %89 : vector<4x256xi1>, vector<4x256xf32>
    %c5 = arith.constant 5 : index
    %c0_50 = arith.constant 0 : index
    %c0_51 = arith.constant 0 : index
    %91 = vector.load %arg4[%c5, %c0_50, %c0_51] : memref<9x8x4xf32, #tpu.memory_space<vmem>>, vector<1x8x4xf32>
    %92 = vector.shape_cast %91 : vector<1x8x4xf32> to vector<8x4xf32>
    %cst_52 = arith.constant dense<0.000000e+00> : vector<8x256xf32>
    %93 = tpu.matmul %92, %90, %cst_52 {dimension_numbers = #tpu.dot_dimension_numbers<[1], [0], [0], [1], [0, 0, 1, 1], [], []>} : vector<8x4xf32>, vector<4x256xf32>, vector<8x256xf32> -> vector<8x256xf32>
    %94 = arith.addf %80, %93 : vector<8x256xf32>
    %c0_53 = arith.constant 0 : index
    %c32 = arith.constant 32 : index
    %95 = vector.load %arg6[%c0_53, %c32] : memref<4x290xf32, #tpu.memory_space<vmem>>, vector<4x256xf32>
    %c1_i32_54 = arith.constant 1 : i32
    %96 = vector.broadcast %c1_i32_54 : i32 to vector<1x256xi32>
    %97 = arith.cmpi sge, %27, %96 : vector<1x256xi32>
    %c17_i32_55 = arith.constant 17 : i32
    %98 = vector.broadcast %c17_i32_55 : i32 to vector<1x256xi32>
    %99 = arith.cmpi slt, %27, %98 : vector<1x256xi32>
    %100 = arith.andi %97, %99 : vector<1x256xi1>
    %cst_56 = arith.constant 0.000000e+00 : f32
    %101 = vector.shape_cast %100 : vector<1x256xi1> to vector<1x256xi1>
    %102 = vector.broadcast %101 : vector<1x256xi1> to vector<4x256xi1>
    %103 = vector.broadcast %cst_56 : f32 to vector<4x256xf32>
    %104 = arith.select %102, %95, %103 : vector<4x256xi1>, vector<4x256xf32>
    %c6 = arith.constant 6 : index
    %c0_57 = arith.constant 0 : index
    %c0_58 = arith.constant 0 : index
    %105 = vector.load %arg4[%c6, %c0_57, %c0_58] : memref<9x8x4xf32, #tpu.memory_space<vmem>>, vector<1x8x4xf32>
    %106 = vector.shape_cast %105 : vector<1x8x4xf32> to vector<8x4xf32>
    %cst_59 = arith.constant dense<0.000000e+00> : vector<8x256xf32>
    %107 = tpu.matmul %106, %104, %cst_59 {dimension_numbers = #tpu.dot_dimension_numbers<[1], [0], [0], [1], [0, 0, 1, 1], [], []>} : vector<8x4xf32>, vector<4x256xf32>, vector<8x256xf32> -> vector<8x256xf32>
    %108 = arith.addf %94, %107 : vector<8x256xf32>
    %c0_60 = arith.constant 0 : index
    %c33 = arith.constant 33 : index
    %109 = vector.load %arg6[%c0_60, %c33] : memref<4x290xf32, #tpu.memory_space<vmem>>, vector<4x256xf32>
    %c7 = arith.constant 7 : index
    %c0_61 = arith.constant 0 : index
    %c0_62 = arith.constant 0 : index
    %110 = vector.load %arg4[%c7, %c0_61, %c0_62] : memref<9x8x4xf32, #tpu.memory_space<vmem>>, vector<1x8x4xf32>
    %111 = vector.shape_cast %110 : vector<1x8x4xf32> to vector<8x4xf32>
    %cst_63 = arith.constant dense<0.000000e+00> : vector<8x256xf32>
    %112 = tpu.matmul %111, %109, %cst_63 {dimension_numbers = #tpu.dot_dimension_numbers<[1], [0], [0], [1], [0, 0, 1, 1], [], []>} : vector<8x4xf32>, vector<4x256xf32>, vector<8x256xf32> -> vector<8x256xf32>
    %113 = arith.addf %108, %112 : vector<8x256xf32>
    %c0_64 = arith.constant 0 : index
    %c34 = arith.constant 34 : index
    %114 = vector.load %arg6[%c0_64, %c34] : memref<4x290xf32, #tpu.memory_space<vmem>>, vector<4x256xf32>
    %c-1_i32_65 = arith.constant -1 : i32
    %115 = vector.broadcast %c-1_i32_65 : i32 to vector<1x256xi32>
    %116 = arith.cmpi sge, %27, %115 : vector<1x256xi32>
    %c15_i32_66 = arith.constant 15 : i32
    %117 = vector.broadcast %c15_i32_66 : i32 to vector<1x256xi32>
    %118 = arith.cmpi slt, %27, %117 : vector<1x256xi32>
    %119 = arith.andi %116, %118 : vector<1x256xi1>
    %cst_67 = arith.constant 0.000000e+00 : f32
    %120 = vector.shape_cast %119 : vector<1x256xi1> to vector<1x256xi1>
    %121 = vector.broadcast %120 : vector<1x256xi1> to vector<4x256xi1>
    %122 = vector.broadcast %cst_67 : f32 to vector<4x256xf32>
    %123 = arith.select %121, %114, %122 : vector<4x256xi1>, vector<4x256xf32>
    %c8 = arith.constant 8 : index
    %c0_68 = arith.constant 0 : index
    %c0_69 = arith.constant 0 : index
    %124 = vector.load %arg4[%c8, %c0_68, %c0_69] : memref<9x8x4xf32, #tpu.memory_space<vmem>>, vector<1x8x4xf32>
    %125 = vector.shape_cast %124 : vector<1x8x4xf32> to vector<8x4xf32>
    %cst_70 = arith.constant dense<0.000000e+00> : vector<8x256xf32>
    %126 = tpu.matmul %125, %123, %cst_70 {dimension_numbers = #tpu.dot_dimension_numbers<[1], [0], [0], [1], [0, 0, 1, 1], [], []>} : vector<8x4xf32>, vector<4x256xf32>, vector<8x256xf32> -> vector<8x256xf32>
    %127 = arith.addf %113, %126 : vector<8x256xf32>
    %c0_71 = arith.constant 0 : index
    %c0_72 = arith.constant 0 : index
    %c0_73 = arith.constant 0 : index
    %128 = vector.load %arg5[%c0_71, %c0_72, %c0_73] : memref<1x8x256xf32, #tpu.memory_space<vmem>>, vector<1x8x256xf32>
    %129 = vector.shape_cast %128 : vector<1x8x256xf32> to vector<8x256xf32>
    %130 = vector.shape_cast %127 : vector<8x256xf32> to vector<1x8x256xf32>
    tpu.vector_store %arg5[%c0_71, %c0_72, %c0_73], %130 {strides = array<i32>} : memref<1x8x256xf32, #tpu.memory_space<vmem>>, vector<1x8x256xf32>,
    return
  }
  func.func @transform_0(%arg0: i32) -> (i32, i32, i32) {
    %c0_i32 = arith.constant 0 : i32
    %c0_i32_0 = arith.constant 0 : i32
    %c0_i32_1 = arith.constant 0 : i32
    return %arg0, %c0_i32, %c0_i32_0 : i32, i32, i32
  }
  func.func @transform_1(%arg0: i32) -> (i32, i32) {
    %c0_i32 = arith.constant 0 : i32
    %c0_i32_0 = arith.constant 0 : i32
    %c0_i32_1 = arith.constant 0 : i32
    return %c0_i32, %c0_i32_0 : i32, i32
  }
  func.func @transform_2(%arg0: i32) -> (i32, i32) {
    %c0_i32 = arith.constant 0 : i32
    %c0_i32_0 = arith.constant 0 : i32
    %c0_i32_1 = arith.constant 0 : i32
    return %c0_i32, %c0_i32_0 : i32, i32
  }
  func.func @transform_3(%arg0: i32) -> (i32, i32, i32) {
    %c0_i32 = arith.constant 0 : i32
    %c0_i32_0 = arith.constant 0 : i32
    %c0_i32_1 = arith.constant 0 : i32
    %c0_i32_2 = arith.constant 0 : i32
    return %c0_i32, %c0_i32_0, %c0_i32_1 : i32, i32, i32
  }
  func.func @transform_4(%arg0: i32) -> (i32, i32, i32) {
    %c0_i32 = arith.constant 0 : i32
    %c0_i32_0 = arith.constant 0 : i32
    %c0_i32_1 = arith.constant 0 : i32
    return %arg0, %c0_i32, %c0_i32_0 : i32, i32, i32
  }
}

</mosaic_0001>

<llo_original>
// kernel: tpu_custom_call.1
$region0: #{tpu_custom_call.1}
  #allocation0 [shape = 'u32[]', space=smem, size = 0x4, offset = 0x4, fixed_abs, tag = 'smem constant byte address 0x4 - core index']
  #allocation1 [shape = 'u32[144,128]{1,0:T(1,128)}', space=vmem, size = 0x12000, scoped, tag = 'internal scratch']
  #allocation2 [shape = 'f32[4,290]{1,0:T(4,128)}', space=vmem, size = 0x1800, scoped, tag = 'scratch operand']
  %s0 = inlined_call_operand.vmem [shape: f32[2,4,256], index: 0, kind: input, shape index: {}]
  %s1 = inlined_call_operand.vmem [shape: f32[4,4], index: 1, kind: input, shape index: {}]
  %s2 = inlined_call_operand.vmem [shape: f32[4,1], index: 2, kind: input, shape index: {}]
  %s3 = inlined_call_operand.vmem [shape: f32[9,8,4], index: 3, kind: input, shape index: {}]
  %s4 = inlined_call_operand.hbm [shape: f32[2,8,256], index: 4, kind: output, shape index: {}]
  %s5 = sld [smem:[#allocation0]]
  $region49: #{tpu_custom_call.1} parent=0
    _
  %s7 = ssub.s32 1, %s5
  %s8 = scalar_select 0, %s7, %s5
  $region1: #{tpu_custom_call.1} parent=0
    #allocation3 [shape = 'u8[16384]{0}', space=vmem, size = 0x4000, scoped, tag = 'output window, operand 0']
    #allocation4 [shape = 's32[2]{0}', space=sflag, size = 0x8, scoped, tag = 'scoped memory for tpu_custom_call.1']
    %9 = vsyncpa [#allocation4], 0
    %s10 = scalar_lea.sflag [#allocation4], 1
    %11 = vsyncpa %s10, 0
    loop: start=0, step=1, limit=4
    $region2: #{tpu_custom_call.1} parent=1 // loop_pre_header
      _
    $region3: #{tpu_custom_call.1} parent=1 // loop_header
      %s13 = sphi 0, %s17
      %p14 = scmp.ge.s32.totalorder %s13, 4
      %s23 = sphi 0, %s25
      %s26 = sphi 0, %s23
      %s27 = sphi 0, %s26
      %s43 = sphi 0, %s27
      %s47 = sphi 0, %s47
      %s49 = sphi 0, %s47
      %s50 = sphi 0, %s49
      %s64 = sphi 0, %s50
      %s68 = sphi 0, %s68
      %s70 = sphi 0, %s68
      %s71 = sphi 0, %s70
      %s85 = sphi 0, %s71
      %s89 = sphi 0, %s89
      %s91 = sphi 0, %s89
      %s92 = sphi 0, %s91
      %s106 = sphi 0, %s92
      %s112 = sphi 0, %s114
      %s115 = sphi 0, %s112
      %s116 = sphi 0, %s115
      %s132 = sphi 0, %s116
    $region4: #{tpu_custom_call.1} parent=1 // loop_header_branch
      %16 = sbr.rel (%p14) target = $region8
    $region5: #{tpu_custom_call.1} parent=1 // loop_body
      %s18 = ssub.s32 %s13, 1
      %s19 = ssub.s32 %s13, 2
      %s20 = sadd.s32 %s13, 1
      %s21 = ssub.s32 %s13, %s20
      %p22 = scmp.eq.s32.totalorder %s21, 0
      %s24 = sadd.s32 %s23, 1
      %s25 = scalar_select %p22, %s23, %s24
      %p28 = pneg %p22
      %p29 = scmp.eq.s32.totalorder %s13, 1
      %p30 = por %p28, %p29
      %p31 = scmp.ne.s32.totalorder %s23, %s26
      %p32 = scmp.eq.s32.totalorder %s13, 0
      %p33 = por %p31, %p32
      %p34 = scmp.ne.s32.totalorder %s23, %s26
      %p35 = scmp.eq.s32.totalorder %s18, 1
      %p36 = por %p34, %p35
      %p37 = scmp.ne.s32.totalorder %s26, %s27
      %p38 = scmp.eq.s32.totalorder %s18, 0
      %p39 = por %p37, %p38
      %p40 = scmp.ne.s32.totalorder %s26, %s27
      %p41 = scmp.eq.s32.totalorder %s19, 1
      %p42 = por %p40, %p41
      %p44 = scmp.ne.s32.totalorder %s27, %s43
      %p45 = scmp.eq.s32.totalorder %s19, 0
      %p46 = por %p44, %p45
      %s48 = sadd.s32 %s47, 1
      %p51 = scmp.eq.s32.totalorder %s13, 1
      %p52 = scmp.ne.s32.totalorder %s47, %s49
      %p53 = scmp.eq.s32.totalorder %s13, 0
      %p54 = por %p52, %p53
      %p55 = scmp.ne.s32.totalorder %s47, %s49
      %p56 = scmp.eq.s32.totalorder %s18, 1
      %p57 = por %p55, %p56
      %p58 = scmp.ne.s32.totalorder %s49, %s50
      %p59 = scmp.eq.s32.totalorder %s18, 0
      %p60 = por %p58, %p59
      %p61 = scmp.ne.s32.totalorder %s49, %s50
      %p62 = scmp.eq.s32.totalorder %s19, 1
      %p63 = por %p61, %p62
      %p65 = scmp.ne.s32.totalorder %s50, %s64
      %p66 = scmp.eq.s32.totalorder %s19, 0
      %p67 = por %p65, %p66
      %s69 = sadd.s32 %s68, 1
      %p72 = scmp.eq.s32.totalorder %s13, 1
      %p73 = scmp.ne.s32.totalorder %s68, %s70
      %p74 = scmp.eq.s32.totalorder %s13, 0
      %p75 = por %p73, %p74
      %p76 = scmp.ne.s32.totalorder %s68, %s70
      %p77 = scmp.eq.s32.totalorder %s18, 1
      %p78 = por %p76, %p77
      %p79 = scmp.ne.s32.totalorder %s70, %s71
      %p80 = scmp.eq.s32.totalorder %s18, 0
      %p81 = por %p79, %p80
      %p82 = scmp.ne.s32.totalorder %s70, %s71
      %p83 = scmp.eq.s32.totalorder %s19, 1
      %p84 = por %p82, %p83
      %p86 = scmp.ne.s32.totalorder %s71, %s85
      %p87 = scmp.eq.s32.totalorder %s19, 0
      %p88 = por %p86, %p87
      %s90 = sadd.s32 %s89, 1
      %p93 = scmp.eq.s32.totalorder %s13, 1
      %p94 = scmp.ne.s32.totalorder %s89, %s91
      %p95 = scmp.eq.s32.totalorder %s13, 0
      %p96 = por %p94, %p95
      %p97 = scmp.ne.s32.totalorder %s89, %s91
      %p98 = scmp.eq.s32.totalorder %s18, 1
      %p99 = por %p97, %p98
      %p100 = scmp.ne.s32.totalorder %s91, %s92
      %p101 = scmp.eq.s32.totalorder %s18, 0
      %p102 = por %p100, %p101
      %p103 = scmp.ne.s32.totalorder %s91, %s92
      %p104 = scmp.eq.s32.totalorder %s19, 1
      %p105 = por %p103, %p104
      %p107 = scmp.ne.s32.totalorder %s92, %s106
      %p108 = scmp.eq.s32.totalorder %s19, 0
      %p109 = por %p107, %p108
      %s110 = ssub.s32 %s13, %s20
      %p111 = scmp.eq.s32.totalorder %s110, 0
      %s113 = sadd.s32 %s112, 1
      %s114 = scalar_select %p111, %s112, %s113
      %p117 = pneg %p111
      %p118 = scmp.eq.s32.totalorder %s13, 1
      %p119 = por %p117, %p118
      %p120 = scmp.ne.s32.totalorder %s112, %s115
      %p121 = scmp.eq.s32.totalorder %s13, 0
      %p122 = por %p120, %p121
      %p123 = scmp.ne.s32.totalorder %s112, %s115
      %p124 = scmp.eq.s32.totalorder %s18, 1
      %p125 = por %p123, %p124
      %p126 = scmp.ne.s32.totalorder %s115, %s116
      %p127 = scmp.eq.s32.totalorder %s18, 0
      %p128 = por %p126, %p127
      %p129 = scmp.ne.s32.totalorder %s115, %s116
      %p130 = scmp.eq.s32.totalorder %s19, 1
      %p131 = por %p129, %p130
      %p133 = scmp.ne.s32.totalorder %s116, %s132
      %p134 = scmp.eq.s32.totalorder %s19, 0
      %p135 = por %p133, %p134
      %p136 = scmp.le.s32.totalorder 1, %s13
      %p137 = scmp.lt.s32.totalorder %s13, 3
      %p138 = pnand %p136, %p137
      %p139 = pneg %p138
      // Predicated region
      $region9: #{tpu_custom_call.1} parent=5 // pred_check
        _
      $region10: #{tpu_custom_call.1} parent=5 // pred_check_branch
        %141 = sbr.rel (%p138) target = $region12
      $region11: #{tpu_custom_call.1} parent=5 // pred_region
        %s142 = ssub.s32 %s13, 1
        // Predicated region
        $region13: #{tpu_custom_call.1} parent=11 // pred_check
          %p143 = pneg %p60
        $region14: #{tpu_custom_call.1} parent=11 // pred_check_branch
          %145 = sbr.rel (%p143) target = $region16
        $region15: #{tpu_custom_call.1} parent=11 // pred_region
          _
        $region16: #{tpu_custom_call.1} parent=11 // pred_fallthru
          _
        // Predicated region
        $region17: #{tpu_custom_call.1} parent=11 // pred_check
          %p146 = pneg %p81
        $region18: #{tpu_custom_call.1} parent=11 // pred_check_branch
          %148 = sbr.rel (%p146) target = $region20
        $region19: #{tpu_custom_call.1} parent=11 // pred_region
          _
        $region20: #{tpu_custom_call.1} parent=11 // pred_fallthru
          _
        // Predicated region
        $region21: #{tpu_custom_call.1} parent=11 // pred_check
          %p149 = pneg %p102
        $region22: #{tpu_custom_call.1} parent=11 // pred_check_branch
          %151 = sbr.rel (%p149) target = $region24
        $region23: #{tpu_custom_call.1} parent=11 // pred_region
          _
        $region24: #{tpu_custom_call.1} parent=11 // pred_fallthru
          _
      $region12: #{tpu_custom_call.1} parent=5 // pred_fallthru
        _
      %p152 = scmp.lt.s32.totalorder %s13, 2
      // Predicated region
      $region25: #{tpu_custom_call.1} parent=5 // pred_check
        %p153 = pneg %p152
      $region26: #{tpu_custom_call.1} parent=5 // pred_check_branch
        %155 = sbr.rel (%p153) target = $region28
      $region27: #{tpu_custom_call.1} parent=5 // pred_region
        // Predicated region
        $region29: #{tpu_custom_call.1} parent=27 // pred_check
          %p156 = pneg %p33
        $region30: #{tpu_custom_call.1} parent=27 // pred_check_branch
          %158 = sbr.rel (%p156) target = $region32
        $region31: #{tpu_custom_call.1} parent=27 // pred_region
          %p159 = scmp.lt.s32.totalorder %s13, 1
          %s160 = scalar_select %p159, %s13, 1
          %s161 = smul.addr %s160, 2
          %s162 = smul.addr %s161, 4
          %s163 = scalar_lea.vmem %s0, %s162
        $region32: #{tpu_custom_call.1} parent=27 // pred_fallthru
          _
      $region28: #{tpu_custom_call.1} parent=5 // pred_fallthru
        _
      %p164 = scmp.le.s32.totalorder 1, %s13
      %p165 = scmp.lt.s32.totalorder %s13, 3
      %p166 = pnand %p164, %p165
      %p167 = pneg %p166
      // Predicated region
      $region33: #{tpu_custom_call.1} parent=5 // pred_check
        _
      $region34: #{tpu_custom_call.1} parent=5 // pred_check_branch
        %169 = sbr.rel (%p166) target = $region36
      $region35: #{tpu_custom_call.1} parent=5 // pred_region
        %s170 = ssub.s32 %s13, 1
        %p171 = scmp.lt.s32.totalorder %s18, 1
        %s172 = scalar_select %p171, %s18, 1
        %s173 = smul.addr %s172, 2
        %s174 = smul.addr %s173, 4
        %s175 = scalar_lea.vmem %s0, %s174
        %p176 = pneg %p39
        %p177 = pneg %p36
        %p178 = pneg %p60
        %p179 = pneg %p57
        %p180 = pneg %p81
        %p181 = pneg %p78
        %p182 = pneg %p102
        %p183 = pneg %p99
        %p184 = pneg %p128
        %p185 = pneg %p125
        %s186 = sand.u32 %s115, 1
        %s187 = scalar_lea.sflag [#allocation4], %s186
        %s188 = sand.u32 %s115, 1
        %s189 = smul.addr %s188, 16
        %s190 = scalar_lea.vmem [#allocation3], %s189
        %p191 = scmp.lt.s32.totalorder %s18, 1
        %s192 = scalar_select %p191, %s18, 1
        %s193 = smul.addr %s192, 2
        %s194 = smul.addr %s193, 4
        %s195 = scalar_lea.vmem %s0, %s194
        %v196 = vld [vmem:[%s195] sm:$0xff]
        %v197 = vld [vmem:[%s1] sm:$0xf]
        %v198 = vld [vmem:[%s2] sm:$0xf]
        %200 = vset.pattern.permute.xlu0 0
        %201 = vperm.xlu0 %200, %v198
        %v202 = vpop.permute.xlu0 %201
        %v205 = vcombine.high %v196, %v196
        %vm206 = vcmask 31744
        %v208 = vsel %vm206, %v197, 0
        %vm210 = vcmask 1043456
        %v211 = vsel %vm210, %v196, 0
        %v213 = vsel %vm210, %v205, 0
        %215 = vmatprep.subr.mxu0 %v213
        %216 = vmatpush1.msra.mxu0 %v211
        %217 = vmatprep.subr.mxu0 0.0
        %218 = vmatpush1.msra.mxu0 0.0
        %219 = vmatprep.subr.mxu0 0.0
        %220 = vmatpush1.msra.mxu0 0.0
        %221 = vmatprep.subr.mxu0 0.0
        %222 = vmatpush1.msra.mxu0 0.0
        %223 = vmatprep.subr.mxu0 0.0
        %224 = vmatpush1.msra.mxu0 0.0
        %225 = vmatprep.subr.mxu0 0.0
        %226 = vmatpush1.msra.mxu0 0.0
        %227 = vmatprep.subr.mxu0 0.0
        %228 = vmatpush1.msra.mxu0 0.0
        %229 = vmatprep.subr.mxu0 0.0
        %230 = vmatpush1.msra.mxu0 0.0
        %231 = vmatprep.subr.mxu0 0.0
        %232 = vmatpush1.msra.mxu0 0.0
        %233 = vmatprep.subr.mxu0 0.0
        %234 = vmatpush1.msra.mxu0 0.0
        %235 = vmatprep.subr.mxu0 0.0
        %236 = vmatpush1.msra.mxu0 0.0
        %237 = vmatprep.subr.mxu0 0.0
        %238 = vmatpush1.msra.mxu0 0.0
        %239 = vmatprep.subr.mxu0 0.0
        %240 = vmatpush1.msra.mxu0 0.0
        %241 = vmatprep.subr.mxu0 0.0
        %242 = vmatpush1.msra.mxu0 0.0
        %243 = vmatprep.subr.mxu0 0.0
        %244 = vmatpush1.msra.mxu0 0.0
        %245 = vmatprep.subr.mxu0 0.0
        %246 = vmatpush1.msra.mxu0 0.0
        %247 = vmatprep.subr.mxu0 0.0
        %248 = vmatpush1.msra.mxu0 0.0
        %249 = vmatprep.subr.mxu0 0.0
        %250 = vmatpush1.msra.mxu0 0.0
        %251 = vmatprep.subr.mxu0 0.0
        %252 = vmatpush1.msra.mxu0 0.0
        %253 = vmatprep.subr.mxu0 0.0
        %254 = vmatpush1.msra.mxu0 0.0
        %255 = vmatprep.subr.mxu0 0.0
        %256 = vmatpush1.msra.mxu0 0.0
        %257 = vmatprep.subr.mxu0 0.0
        %258 = vmatpush1.msra.mxu0 0.0
        %259 = vmatprep.subr.mxu0 0.0
        %260 = vmatpush1.msra.mxu0 0.0
        %261 = vmatprep.subr.mxu0 0.0
        %262 = vmatpush1.msra.mxu0 0.0
        %263 = vmatprep.subr.mxu0 0.0
        %264 = vmatpush1.msra.mxu0 0.0
        %265 = vmatprep.subr.mxu0 0.0
        %266 = vmatpush1.msra.mxu0 0.0
        %267 = vmatprep.subr.mxu0 0.0
        %268 = vmatpush1.msra.mxu0 0.0
        %269 = vmatprep.subr.mxu0 0.0
        %270 = vmatpush1.msra.mxu0 0.0
        %271 = vmatprep.subr.mxu0 0.0
        %272 = vmatpush1.msra.mxu0 0.0
        %273 = vmatprep.subr.mxu0 0.0
        %274 = vmatpush1.msra.mxu0 0.0
        %275 = vmatprep.subr.mxu0 0.0
        %276 = vmatpush1.msra.mxu0 0.0
        %277 = vmatprep.subr.mxu0 0.0
        %278 = vmatpush1.msra.mxu0 0.0
        %279 = vmatprep.mubr.f32.mxu0 0.0
        %280 = vmatmul.mubr.f32.gmra.mrb[0].mxu0 %v208
        %v281 = vpop.f32.mrb[0].mxu0
        %v282 = vadd.f32 %v202, %v281
        %v283 = vpop.f32.mrb[0].mxu0
        %v284 = vadd.f32 %v202, %v283
        %285 = vdwg.mxu0
        %vm286 = vcmask 134144
        %287 = vst.msk [vmem:[#allocation2] sm:$0xf] %vm286, 0.0
        %vm288 = vcmask 273544
        %289 = vst.msk [vmem:[#allocation2 + $0x8] sm:$0xf] %vm288, 0.0
        %v292 = vcombine.low %v282, %v284
        %293 = vrot.lane.b32.xlu0 %v292, 17
        %v294 = vpop.permute.xlu0 %293
        %v295 = vrot.slane %v294, 4
        %vm296 = vcmask 138240
        %v297 = vsel %vm296, %v295, %v294
        %vm300 = vcmask 1043592
        %vm301 = vcmask 1047556
        %vm302 = vmor %vm301, %vm300
        %303 = vst.msk [vmem:[#allocation2] sm:$0xff] %vm302, %v297
        %304 = vst.msk [vmem:[#allocation2 + $0x8] sm:$0xf] %vm286, %v295
        %v305 = vlaneseq
        %v306 = vand.u32 %v305, 127
        %v307 = vadd.s32 %v306, 128
        %vm308 = vcmp.lt.s32.totalorder %v306, 0
        %v309 = vsub.s32 0, %v306
        %v310 = vsel %vm308, %v309, %v306
        %v311 = vshrl.u32 %v310, 4
        %v312 = vand.u32 %v310, 15
        %v313 = vsub.s32 0, %v312
        %v314 = vsel %vm308, %v313, %v312
        %vm315 = vcmp.lt.s32.totalorder %v307, 0
        %v316 = vsub.s32 0, %v307
        %v317 = vsel %vm315, %v316, %v307
        %v318 = vshrl.u32 %v317, 4
        %v319 = vand.u32 %v317, 15
        %v320 = vsub.s32 0, %v319
        %v321 = vsel %vm315, %v320, %v319
        %vm322 = vcmp.ne.s32.totalorder %v314, 0
        %vm323 = vcmp.ne.s32.totalorder %v321, 0
        %vm324 = vcmp.lt.s32.totalorder %v314, 0
        %vm325 = vcmp.lt.s32.totalorder %v321, 0
        %vm326 = vmand %vm324, %vm322
        %vm327 = vmand %vm325, %vm323
        %v328 = vadd.s32 %v314, 16
        %v329 = vadd.s32 %v321, 16
        %v330 = vsel %vm326, %v328, %v314
        %v331 = vsel %vm327, %v329, %v321
        %v332 = vld [vmem:[#allocation2] sm:$0xff]
        %vm333 = vcmp.ge.s32.totalorder %v330, 1
        %vm334 = vcmp.ge.s32.totalorder %v331, 1
        %vm335 = vcmp.lt.s32.totalorder %v330, 17
        %vm336 = vcmp.lt.s32.totalorder %v331, 17
        %vm337 = vmand %vm333, %vm335
        %vm338 = vmand %vm334, %vm336
        %v339 = vsel %vm337, 1, 0
        %v340 = vsel %vm338, 1, 0
        %vm341 = vcmp.eq.s32.totalorder %v339, 1
        %vm342 = vcmp.eq.s32.totalorder %v340, 1
        %v344 = vcombine.high %v332, %v332
        %v346 = vsel %vm341, %v332, 0.0
        %v347 = vsel %vm342, %v344, 0.0
        %v348 = vld [vmem:[%s3] sm:$0xff]
        %v349 = vld [vmem:[#allocation2 + $0x8] sm:$0xf]
        %s350 = scalar_lea.vmem %s3, 8
        %v351 = vld [vmem:[%s350] sm:$0xff]
        %353 = vrot.lane.b32.xlu0 %v332, 127
        %v354 = vpop.permute.xlu0 %353
        %355 = vrot.lane.b32.xlu0 %v344, 127
        %v356 = vpop.permute.xlu0 %355
        %357 = vrot.lane.b32.xlu0 %v349, 127
        %v358 = vpop.permute.xlu0 %357
        %vm359 = vcmask 1039360
        %v360 = vsel %vm359, %v354, %v356
        %v361 = vsel %vm359, %v356, %v358
        %v363 = vsel %vm206, %v351, 0
        %v365 = vsel %vm210, %v360, 0
        %v367 = vsel %vm210, %v361, 0
        %369 = vmatprep.subr.mxu0 %v367
        %370 = vmatpush1.msra.mxu0 %v365
        %371 = vmatprep.subr.mxu0 0.0
        %372 = vmatpush1.msra.mxu0 0.0
        %373 = vmatprep.subr.mxu0 0.0
        %374 = vmatpush1.msra.mxu0 0.0
        %375 = vmatprep.subr.mxu0 0.0
        %376 = vmatpush1.msra.mxu0 0.0
        %377 = vmatprep.subr.mxu0 0.0
        %378 = vmatpush1.msra.mxu0 0.0
        %379 = vmatprep.subr.mxu0 0.0
        %380 = vmatpush1.msra.mxu0 0.0
        %381 = vmatprep.subr.mxu0 0.0
        %382 = vmatpush1.msra.mxu0 0.0
        %383 = vmatprep.subr.mxu0 0.0
        %384 = vmatpush1.msra.mxu0 0.0
        %385 = vmatprep.subr.mxu0 0.0
        %386 = vmatpush1.msra.mxu0 0.0
        %387 = vmatprep.subr.mxu0 0.0
        %388 = vmatpush1.msra.mxu0 0.0
        %389 = vmatprep.subr.mxu0 0.0
        %390 = vmatpush1.msra.mxu0 0.0
        %391 = vmatprep.subr.mxu0 0.0
        %392 = vmatpush1.msra.mxu0 0.0
        %393 = vmatprep.subr.mxu0 0.0
        %394 = vmatpush1.msra.mxu0 0.0
        %395 = vmatprep.subr.mxu0 0.0
        %396 = vmatpush1.msra.mxu0 0.0
        %397 = vmatprep.subr.mxu0 0.0
        %398 = vmatpush1.msra.mxu0 0.0
        %399 = vmatprep.subr.mxu0 0.0
        %400 = vmatpush1.msra.mxu0 0.0
        %401 = vmatprep.subr.mxu0 0.0
        %402 = vmatpush1.msra.mxu0 0.0
        %403 = vmatprep.subr.mxu0 0.0
        %404 = vmatpush1.msra.mxu0 0.0
        %405 = vmatprep.subr.mxu0 0.0
        %406 = vmatpush1.msra.mxu0 0.0
        %407 = vmatprep.subr.mxu0 0.0
        %408 = vmatpush1.msra.mxu0 0.0
        %409 = vmatprep.subr.mxu0 0.0
        %410 = vmatpush1.msra.mxu0 0.0
        %411 = vmatprep.subr.mxu0 0.0
        %412 = vmatpush1.msra.mxu0 0.0
        %413 = vmatprep.subr.mxu0 0.0
        %414 = vmatpush1.msra.mxu0 0.0
        %415 = vmatprep.subr.mxu0 0.0
        %416 = vmatpush1.msra.mxu0 0.0
        %417 = vmatprep.subr.mxu0 0.0
        %418 = vmatpush1.msra.mxu0 0.0
        %419 = vmatprep.subr.mxu0 0.0
        %420 = vmatpush1.msra.mxu0 0.0
        %421 = vmatprep.subr.mxu0 0.0
        %422 = vmatpush1.msra.mxu0 0.0
        %423 = vmatprep.subr.mxu0 0.0
        %424 = vmatpush1.msra.mxu0 0.0
        %425 = vmatprep.subr.mxu0 0.0
        %426 = vmatpush1.msra.mxu0 0.0
        %427 = vmatprep.subr.mxu0 0.0
        %428 = vmatpush1.msra.mxu0 0.0
        %429 = vmatprep.subr.mxu0 0.0
        %430 = vmatpush1.msra.mxu0 0.0
        %431 = vmatprep.subr.mxu0 0.0
        %432 = vmatpush1.msra.mxu0 0.0
        %433 = vmatprep.mubr.f32.mxu0 0.0
        %434 = vmatmul.mubr.f32.gmra.mrb[0].mxu0 %v363
        %v435 = vpop.f32.mrb[0].mxu0
        %v436 = vadd.f32 0.0, %v435
        %v437 = vpop.f32.mrb[0].mxu0
        %v438 = vadd.f32 0.0, %v437
        %439 = vdwg.mxu0
        %v441 = vsel %vm206, %v348, 0
        %v444 = vsel %vm210, %v346, 0
        %v447 = vsel %vm210, %v347, 0
        %449 = vmatprep.subr.mxu0 %v447
        %450 = vmatpush1.msra.mxu0 %v444
        %451 = vmatprep.subr.mxu0 0.0
        %452 = vmatpush1.msra.mxu0 0.0
        %453 = vmatprep.subr.mxu0 0.0
        %454 = vmatpush1.msra.mxu0 0.0
        %455 = vmatprep.subr.mxu0 0.0
        %456 = vmatpush1.msra.mxu0 0.0
        %457 = vmatprep.subr.mxu0 0.0
        %458 = vmatpush1.msra.mxu0 0.0
        %459 = vmatprep.subr.mxu0 0.0
        %460 = vmatpush1.msra.mxu0 0.0
        %461 = vmatprep.subr.mxu0 0.0
        %462 = vmatpush1.msra.mxu0 0.0
        %463 = vmatprep.subr.mxu0 0.0
        %464 = vmatpush1.msra.mxu0 0.0
        %465 = vmatprep.subr.mxu0 0.0
        %466 = vmatpush1.msra.mxu0 0.0
        %467 = vmatprep.subr.mxu0 0.0
        %468 = vmatpush1.msra.mxu0 0.0
        %469 = vmatprep.subr.mxu0 0.0
        %470 = vmatpush1.msra.mxu0 0.0
        %471 = vmatprep.subr.mxu0 0.0
        %472 = vmatpush1.msra.mxu0 0.0
        %473 = vmatprep.subr.mxu0 0.0
        %474 = vmatpush1.msra.mxu0 0.0
        %475 = vmatprep.subr.mxu0 0.0
        %476 = vmatpush1.msra.mxu0 0.0
        %477 = vmatprep.subr.mxu0 0.0
        %478 = vmatpush1.msra.mxu0 0.0
        %479 = vmatprep.subr.mxu0 0.0
        %480 = vmatpush1.msra.mxu0 0.0
        %481 = vmatprep.subr.mxu0 0.0
        %482 = vmatpush1.msra.mxu0 0.0
        %483 = vmatprep.subr.mxu0 0.0
        %484 = vmatpush1.msra.mxu0 0.0
        %485 = vmatprep.subr.mxu0 0.0
        %486 = vmatpush1.msra.mxu0 0.0
        %487 = vmatprep.subr.mxu0 0.0
        %488 = vmatpush1.msra.mxu0 0.0
        %489 = vmatprep.subr.mxu0 0.0
        %490 = vmatpush1.msra.mxu0 0.0
        %491 = vmatprep.subr.mxu0 0.0
        %492 = vmatpush1.msra.mxu0 0.0
        %493 = vmatprep.subr.mxu0 0.0
        %494 = vmatpush1.msra.mxu0 0.0
        %495 = vmatprep.subr.mxu0 0.0
        %496 = vmatpush1.msra.mxu0 0.0
        %497 = vmatprep.subr.mxu0 0.0
        %498 = vmatpush1.msra.mxu0 0.0
        %499 = vmatprep.subr.mxu0 0.0
        %500 = vmatpush1.msra.mxu0 0.0
        %501 = vmatprep.subr.mxu0 0.0
        %502 = vmatpush1.msra.mxu0 0.0
        %503 = vmatprep.subr.mxu0 0.0
        %504 = vmatpush1.msra.mxu0 0.0
        %505 = vmatprep.subr.mxu0 0.0
        %506 = vmatpush1.msra.mxu0 0.0
        %507 = vmatprep.subr.mxu0 0.0
        %508 = vmatpush1.msra.mxu0 0.0
        %509 = vmatprep.subr.mxu0 0.0
        %510 = vmatpush1.msra.mxu0 0.0
        %511 = vmatprep.subr.mxu0 0.0
        %512 = vmatpush1.msra.mxu0 0.0
        %513 = vmatprep.mubr.f32.mxu0 0.0
        %514 = vmatmul.mubr.f32.gmra.mrb[0].mxu0 %v441
        %v515 = vpop.f32.mrb[0].mxu0
        %v516 = vadd.f32 %v436, %v515
        %v517 = vpop.f32.mrb[0].mxu0
        %v518 = vadd.f32 %v438, %v517
        %519 = vdwg.mxu0
        %v520 = vld [vmem:[#allocation2] sm:$0xff]
        %v521 = vld [vmem:[#allocation2 + $0x8] sm:$0xf]
        %vm522 = vcmp.ge.s32.totalorder %v330, 4294967295
        %vm523 = vcmp.ge.s32.totalorder %v331, 4294967295
        %vm524 = vcmp.lt.s32.totalorder %v330, 15
        %vm525 = vcmp.lt.s32.totalorder %v331, 15
        %vm526 = vmand %vm522, %vm524
        %vm527 = vmand %vm523, %vm525
        %v528 = vsel %vm526, 1, 0
        %v529 = vsel %vm527, 1, 0
        %vm530 = vcmp.eq.s32.totalorder %v528, 1
        %vm531 = vcmp.eq.s32.totalorder %v529, 1
        %v534 = vcombine.high %v520, %v520
        %535 = vrot.lane.b32.xlu0 %v520, 126
        %v536 = vpop.permute.xlu0 %535
        %537 = vrot.lane.b32.xlu0 %v534, 126
        %v538 = vpop.permute.xlu0 %537
        %539 = vrot.lane.b32.xlu0 %v521, 126
        %v540 = vpop.permute.xlu0 %539
        %vm541 = vcmask 1031168
        %v542 = vsel %vm541, %v536, %v538
        %v543 = vsel %vm541, %v538, %v540
        %v546 = vsel %vm530, %v542, 0.0
        %v547 = vsel %vm531, %v543, 0.0
        %s548 = scalar_lea.vmem %s3, 16
        %v549 = vld [vmem:[%s548] sm:$0xff]
        %v551 = vsel %vm206, %v549, 0
        %v554 = vsel %vm210, %v546, 0
        %v557 = vsel %vm210, %v547, 0
        %559 = vmatprep.subr.mxu0 %v557
        %560 = vmatpush1.msra.mxu0 %v554
        %561 = vmatprep.subr.mxu0 0.0
        %562 = vmatpush1.msra.mxu0 0.0
        %563 = vmatprep.subr.mxu0 0.0
        %564 = vmatpush1.msra.mxu0 0.0
        %565 = vmatprep.subr.mxu0 0.0
        %566 = vmatpush1.msra.mxu0 0.0
        %567 = vmatprep.subr.mxu0 0.0
        %568 = vmatpush1.msra.mxu0 0.0
        %569 = vmatprep.subr.mxu0 0.0
        %570 = vmatpush1.msra.mxu0 0.0
        %571 = vmatprep.subr.mxu0 0.0
        %572 = vmatpush1.msra.mxu0 0.0
        %573 = vmatprep.subr.mxu0 0.0
        %574 = vmatpush1.msra.mxu0 0.0
        %575 = vmatprep.subr.mxu0 0.0
        %576 = vmatpush1.msra.mxu0 0.0
        %577 = vmatprep.subr.mxu0 0.0
        %578 = vmatpush1.msra.mxu0 0.0
        %579 = vmatprep.subr.mxu0 0.0
        %580 = vmatpush1.msra.mxu0 0.0
        %581 = vmatprep.subr.mxu0 0.0
        %582 = vmatpush1.msra.mxu0 0.0
        %583 = vmatprep.subr.mxu0 0.0
        %584 = vmatpush1.msra.mxu0 0.0
        %585 = vmatprep.subr.mxu0 0.0
        %586 = vmatpush1.msra.mxu0 0.0
        %587 = vmatprep.subr.mxu0 0.0
        %588 = vmatpush1.msra.mxu0 0.0
        %589 = vmatprep.subr.mxu0 0.0
        %590 = vmatpush1.msra.mxu0 0.0
        %591 = vmatprep.subr.mxu0 0.0
        %592 = vmatpush1.msra.mxu0 0.0
        %593 = vmatprep.subr.mxu0 0.0
        %594 = vmatpush1.msra.mxu0 0.0
        %595 = vmatprep.subr.mxu0 0.0
        %596 = vmatpush1.msra.mxu0 0.0
        %597 = vmatprep.subr.mxu0 0.0
        %598 = vmatpush1.msra.mxu0 0.0
        %599 = vmatprep.subr.mxu0 0.0
        %600 = vmatpush1.msra.mxu0 0.0
        %601 = vmatprep.subr.mxu0 0.0
        %602 = vmatpush1.msra.mxu0 0.0
        %603 = vmatprep.subr.mxu0 0.0
        %604 = vmatpush1.msra.mxu0 0.0
        %605 = vmatprep.subr.mxu0 0.0
        %606 = vmatpush1.msra.mxu0 0.0
        %607 = vmatprep.subr.mxu0 0.0
        %608 = vmatpush1.msra.mxu0 0.0
        %609 = vmatprep.subr.mxu0 0.0
        %610 = vmatpush1.msra.mxu0 0.0
        %611 = vmatprep.subr.mxu0 0.0
        %612 = vmatpush1.msra.mxu0 0.0
        %613 = vmatprep.subr.mxu0 0.0
        %614 = vmatpush1.msra.mxu0 0.0
        %615 = vmatprep.subr.mxu0 0.0
        %616 = vmatpush1.msra.mxu0 0.0
        %617 = vmatprep.subr.mxu0 0.0
        %618 = vmatpush1.msra.mxu0 0.0
        %619 = vmatprep.subr.mxu0 0.0
        %620 = vmatpush1.msra.mxu0 0.0
        %621 = vmatprep.subr.mxu0 0.0
        %622 = vmatpush1.msra.mxu0 0.0
        %623 = vmatprep.mubr.f32.mxu0 0.0
        %624 = vmatmul.mubr.f32.gmra.mrb[0].mxu0 %v551
        %v625 = vpop.f32.mrb[0].mxu0
        %v626 = vadd.f32 0.0, %v625
        %v627 = vpop.f32.mrb[0].mxu0
        %v628 = vadd.f32 0.0, %v627
        %629 = vdwg.mxu0
        %v630 = vadd.f32 %v516, %v626
        %v631 = vadd.f32 %v518, %v628
        %v632 = vld [vmem:[#allocation2] sm:$0xff]
        %v633 = vld [vmem:[#allocation2 + $0x8] sm:$0xf]
        %v636 = vcombine.high %v632, %v632
        %637 = vrot.lane.b32.xlu0 %v632, 112
        %v638 = vpop.permute.xlu0 %637
        %639 = vrot.lane.b32.xlu0 %v636, 112
        %v640 = vpop.permute.xlu0 %639
        %641 = vrot.lane.b32.xlu0 %v633, 112
        %v642 = vpop.permute.xlu0 %641
        %vm643 = vcmask 916480
        %v644 = vsel %vm643, %v638, %v640
        %v645 = vsel %vm643, %v640, %v642
        %v648 = vsel %vm341, %v644, 0.0
        %v649 = vsel %vm342, %v645, 0.0
        %s650 = scalar_lea.vmem %s3, 24
        %v651 = vld [vmem:[%s650] sm:$0xff]
        %v653 = vsel %vm206, %v651, 0
        %v656 = vsel %vm210, %v648, 0
        %v659 = vsel %vm210, %v649, 0
        %661 = vmatprep.subr.mxu0 %v659
        %662 = vmatpush1.msra.mxu0 %v656
        %663 = vmatprep.subr.mxu0 0.0
        %664 = vmatpush1.msra.mxu0 0.0
        %665 = vmatprep.subr.mxu0 0.0
        %666 = vmatpush1.msra.mxu0 0.0
        %667 = vmatprep.subr.mxu0 0.0
        %668 = vmatpush1.msra.mxu0 0.0
        %669 = vmatprep.subr.mxu0 0.0
        %670 = vmatpush1.msra.mxu0 0.0
        %671 = vmatprep.subr.mxu0 0.0
        %672 = vmatpush1.msra.mxu0 0.0
        %673 = vmatprep.subr.mxu0 0.0
        %674 = vmatpush1.msra.mxu0 0.0
        %675 = vmatprep.subr.mxu0 0.0
        %676 = vmatpush1.msra.mxu0 0.0
        %677 = vmatprep.subr.mxu0 0.0
        %678 = vmatpush1.msra.mxu0 0.0
        %679 = vmatprep.subr.mxu0 0.0
        %680 = vmatpush1.msra.mxu0 0.0
        %681 = vmatprep.subr.mxu0 0.0
        %682 = vmatpush1.msra.mxu0 0.0
        %683 = vmatprep.subr.mxu0 0.0
        %684 = vmatpush1.msra.mxu0 0.0
        %685 = vmatprep.subr.mxu0 0.0
        %686 = vmatpush1.msra.mxu0 0.0
        %687 = vmatprep.subr.mxu0 0.0
        %688 = vmatpush1.msra.mxu0 0.0
        %689 = vmatprep.subr.mxu0 0.0
        %690 = vmatpush1.msra.mxu0 0.0
        %691 = vmatprep.subr.mxu0 0.0
        %692 = vmatpush1.msra.mxu0 0.0
        %693 = vmatprep.subr.mxu0 0.0
        %694 = vmatpush1.msra.mxu0 0.0
        %695 = vmatprep.subr.mxu0 0.0
        %696 = vmatpush1.msra.mxu0 0.0
        %697 = vmatprep.subr.mxu0 0.0
        %698 = vmatpush1.msra.mxu0 0.0
        %699 = vmatprep.subr.mxu0 0.0
        %700 = vmatpush1.msra.mxu0 0.0
        %701 = vmatprep.subr.mxu0 0.0
        %702 = vmatpush1.msra.mxu0 0.0
        %703 = vmatprep.subr.mxu0 0.0
        %704 = vmatpush1.msra.mxu0 0.0
        %705 = vmatprep.subr.mxu0 0.0
        %706 = vmatpush1.msra.mxu0 0.0
        %707 = vmatprep.subr.mxu0 0.0
        %708 = vmatpush1.msra.mxu0 0.0
        %709 = vmatprep.subr.mxu0 0.0
        %710 = vmatpush1.msra.mxu0 0.0
        %711 = vmatprep.subr.mxu0 0.0
        %712 = vmatpush1.msra.mxu0 0.0
        %713 = vmatprep.subr.mxu0 0.0
        %714 = vmatpush1.msra.mxu0 0.0
        %715 = vmatprep.subr.mxu0 0.0
        %716 = vmatpush1.msra.mxu0 0.0
        %717 = vmatprep.subr.mxu0 0.0
        %718 = vmatpush1.msra.mxu0 0.0
        %719 = vmatprep.subr.mxu0 0.0
        %720 = vmatpush1.msra.mxu0 0.0
        %721 = vmatprep.subr.mxu0 0.0
        %722 = vmatpush1.msra.mxu0 0.0
        %723 = vmatprep.subr.mxu0 0.0
        %724 = vmatpush1.msra.mxu0 0.0
        %725 = vmatprep.mubr.f32.mxu0 0.0
        %726 = vmatmul.mubr.f32.gmra.mrb[0].mxu0 %v653
        %v727 = vpop.f32.mrb[0].mxu0
        %v728 = vadd.f32 0.0, %v727
        %v729 = vpop.f32.mrb[0].mxu0
        %v730 = vadd.f32 0.0, %v729
        %731 = vdwg.mxu0
        %v732 = vadd.f32 %v630, %v728
        %v733 = vadd.f32 %v631, %v730
        %v734 = vld [vmem:[#allocation2] sm:$0xff]
        %v735 = vld [vmem:[#allocation2 + $0x8] sm:$0xf]
        %s736 = scalar_lea.vmem %s3, 32
        %v737 = vld [vmem:[%s736] sm:$0xff]
        %v740 = vcombine.high %v734, %v734
        %741 = vrot.lane.b32.xlu0 %v734, 111
        %v742 = vpop.permute.xlu0 %741
        %743 = vrot.lane.b32.xlu0 %v740, 111
        %v744 = vpop.permute.xlu0 %743
        %745 = vrot.lane.b32.xlu0 %v735, 111
        %v746 = vpop.permute.xlu0 %745
        %vm747 = vcmask 908288
        %v748 = vsel %vm747, %v742, %v744
        %v749 = vsel %vm747, %v744, %v746
        %v751 = vsel %vm206, %v737, 0
        %v753 = vsel %vm210, %v748, 0
        %v755 = vsel %vm210, %v749, 0
        %757 = vmatprep.subr.mxu0 %v755
        %758 = vmatpush1.msra.mxu0 %v753
        %759 = vmatprep.subr.mxu0 0.0
        %760 = vmatpush1.msra.mxu0 0.0
        %761 = vmatprep.subr.mxu0 0.0
        %762 = vmatpush1.msra.mxu0 0.0
        %763 = vmatprep.subr.mxu0 0.0
        %764 = vmatpush1.msra.mxu0 0.0
        %765 = vmatprep.subr.mxu0 0.0
        %766 = vmatpush1.msra.mxu0 0.0
        %767 = vmatprep.subr.mxu0 0.0
        %768 = vmatpush1.msra.mxu0 0.0
        %769 = vmatprep.subr.mxu0 0.0
        %770 = vmatpush1.msra.mxu0 0.0
        %771 = vmatprep.subr.mxu0 0.0
        %772 = vmatpush1.msra.mxu0 0.0
        %773 = vmatprep.subr.mxu0 0.0
        %774 = vmatpush1.msra.mxu0 0.0
        %775 = vmatprep.subr.mxu0 0.0
        %776 = vmatpush1.msra.mxu0 0.0
        %777 = vmatprep.subr.mxu0 0.0
        %778 = vmatpush1.msra.mxu0 0.0
        %779 = vmatprep.subr.mxu0 0.0
        %780 = vmatpush1.msra.mxu0 0.0
        %781 = vmatprep.subr.mxu0 0.0
        %782 = vmatpush1.msra.mxu0 0.0
        %783 = vmatprep.subr.mxu0 0.0
        %784 = vmatpush1.msra.mxu0 0.0
        %785 = vmatprep.subr.mxu0 0.0
        %786 = vmatpush1.msra.mxu0 0.0
        %787 = vmatprep.subr.mxu0 0.0
        %788 = vmatpush1.msra.mxu0 0.0
        %789 = vmatprep.subr.mxu0 0.0
        %790 = vmatpush1.msra.mxu0 0.0
        %791 = vmatprep.subr.mxu0 0.0
        %792 = vmatpush1.msra.mxu0 0.0
        %793 = vmatprep.subr.mxu0 0.0
        %794 = vmatpush1.msra.mxu0 0.0
        %795 = vmatprep.subr.mxu0 0.0
        %796 = vmatpush1.msra.mxu0 0.0
        %797 = vmatprep.subr.mxu0 0.0
        %798 = vmatpush1.msra.mxu0 0.0
        %799 = vmatprep.subr.mxu0 0.0
        %800 = vmatpush1.msra.mxu0 0.0
        %801 = vmatprep.subr.mxu0 0.0
        %802 = vmatpush1.msra.mxu0 0.0
        %803 = vmatprep.subr.mxu0 0.0
        %804 = vmatpush1.msra.mxu0 0.0
        %805 = vmatprep.subr.mxu0 0.0
        %806 = vmatpush1.msra.mxu0 0.0
        %807 = vmatprep.subr.mxu0 0.0
        %808 = vmatpush1.msra.mxu0 0.0
        %809 = vmatprep.subr.mxu0 0.0
        %810 = vmatpush1.msra.mxu0 0.0
        %811 = vmatprep.subr.mxu0 0.0
        %812 = vmatpush1.msra.mxu0 0.0
        %813 = vmatprep.subr.mxu0 0.0
        %814 = vmatpush1.msra.mxu0 0.0
        %815 = vmatprep.subr.mxu0 0.0
        %816 = vmatpush1.msra.mxu0 0.0
        %817 = vmatprep.subr.mxu0 0.0
        %818 = vmatpush1.msra.mxu0 0.0
        %819 = vmatprep.subr.mxu0 0.0
        %820 = vmatpush1.msra.mxu0 0.0
        %821 = vmatprep.mubr.f32.mxu0 0.0
        %822 = vmatmul.mubr.f32.gmra.mrb[0].mxu0 %v751
        %v823 = vpop.f32.mrb[0].mxu0
        %v824 = vadd.f32 0.0, %v823
        %v825 = vpop.f32.mrb[0].mxu0
        %v826 = vadd.f32 0.0, %v825
        %827 = vdwg.mxu0
        %v828 = vadd.f32 %v732, %v824
        %v829 = vadd.f32 %v733, %v826
        %v830 = vld [vmem:[#allocation2] sm:$0xff]
        %v831 = vld [vmem:[#allocation2 + $0x8] sm:$0xf]
        %v834 = vcombine.high %v830, %v830
        %835 = vrot.lane.b32.xlu0 %v830, 110
        %v836 = vpop.permute.xlu0 %835
        %837 = vrot.lane.b32.xlu0 %v834, 110
        %v838 = vpop.permute.xlu0 %837
        %839 = vrot.lane.b32.xlu0 %v831, 110
        %v840 = vpop.permute.xlu0 %839
        %vm841 = vcmask 900096
        %v842 = vsel %vm841, %v836, %v838
        %v843 = vsel %vm841, %v838, %v840
        %v846 = vsel %vm530, %v842, 0.0
        %v847 = vsel %vm531, %v843, 0.0
        %s848 = scalar_lea.vmem %s3, 40
        %v849 = vld [vmem:[%s848] sm:$0xff]
        %v851 = vsel %vm206, %v849, 0
        %v854 = vsel %vm210, %v846, 0
        %v857 = vsel %vm210, %v847, 0
        %859 = vmatprep.subr.mxu0 %v857
        %860 = vmatpush1.msra.mxu0 %v854
        %861 = vmatprep.subr.mxu0 0.0
        %862 = vmatpush1.msra.mxu0 0.0
        %863 = vmatprep.subr.mxu0 0.0
        %864 = vmatpush1.msra.mxu0 0.0
        %865 = vmatprep.subr.mxu0 0.0
        %866 = vmatpush1.msra.mxu0 0.0
        %867 = vmatprep.subr.mxu0 0.0
        %868 = vmatpush1.msra.mxu0 0.0
        %869 = vmatprep.subr.mxu0 0.0
        %870 = vmatpush1.msra.mxu0 0.0
        %871 = vmatprep.subr.mxu0 0.0
        %872 = vmatpush1.msra.mxu0 0.0
        %873 = vmatprep.subr.mxu0 0.0
        %874 = vmatpush1.msra.mxu0 0.0
        %875 = vmatprep.subr.mxu0 0.0
        %876 = vmatpush1.msra.mxu0 0.0
        %877 = vmatprep.subr.mxu0 0.0
        %878 = vmatpush1.msra.mxu0 0.0
        %879 = vmatprep.subr.mxu0 0.0
        %880 = vmatpush1.msra.mxu0 0.0
        %881 = vmatprep.subr.mxu0 0.0
        %882 = vmatpush1.msra.mxu0 0.0
        %883 = vmatprep.subr.mxu0 0.0
        %884 = vmatpush1.msra.mxu0 0.0
        %885 = vmatprep.subr.mxu0 0.0
        %886 = vmatpush1.msra.mxu0 0.0
        %887 = vmatprep.subr.mxu0 0.0
        %888 = vmatpush1.msra.mxu0 0.0
        %889 = vmatprep.subr.mxu0 0.0
        %890 = vmatpush1.msra.mxu0 0.0
        %891 = vmatprep.subr.mxu0 0.0
        %892 = vmatpush1.msra.mxu0 0.0
        %893 = vmatprep.subr.mxu0 0.0
        %894 = vmatpush1.msra.mxu0 0.0
        %895 = vmatprep.subr.mxu0 0.0
        %896 = vmatpush1.msra.mxu0 0.0
        %897 = vmatprep.subr.mxu0 0.0
        %898 = vmatpush1.msra.mxu0 0.0
        %899 = vmatprep.subr.mxu0 0.0
        %900 = vmatpush1.msra.mxu0 0.0
        %901 = vmatprep.subr.mxu0 0.0
        %902 = vmatpush1.msra.mxu0 0.0
        %903 = vmatprep.subr.mxu0 0.0
        %904 = vmatpush1.msra.mxu0 0.0
        %905 = vmatprep.subr.mxu0 0.0
        %906 = vmatpush1.msra.mxu0 0.0
        %907 = vmatprep.subr.mxu0 0.0
        %908 = vmatpush1.msra.mxu0 0.0
        %909 = vmatprep.subr.mxu0 0.0
        %910 = vmatpush1.msra.mxu0 0.0
        %911 = vmatprep.subr.mxu0 0.0
        %912 = vmatpush1.msra.mxu0 0.0
        %913 = vmatprep.subr.mxu0 0.0
        %914 = vmatpush1.msra.mxu0 0.0
        %915 = vmatprep.subr.mxu0 0.0
        %916 = vmatpush1.msra.mxu0 0.0
        %917 = vmatprep.subr.mxu0 0.0
        %918 = vmatpush1.msra.mxu0 0.0
        %919 = vmatprep.subr.mxu0 0.0
        %920 = vmatpush1.msra.mxu0 0.0
        %921 = vmatprep.subr.mxu0 0.0
        %922 = vmatpush1.msra.mxu0 0.0
        %923 = vmatprep.mubr.f32.mxu0 0.0
        %924 = vmatmul.mubr.f32.gmra.mrb[0].mxu0 %v851
        %v925 = vpop.f32.mrb[0].mxu0
        %v926 = vadd.f32 0.0, %v925
        %v927 = vpop.f32.mrb[0].mxu0
        %v928 = vadd.f32 0.0, %v927
        %929 = vdwg.mxu0
        %v930 = vadd.f32 %v828, %v926
        %v931 = vadd.f32 %v829, %v928
        %v932 = vld [vmem:[#allocation2] sm:$0xff]
        %v933 = vld [vmem:[#allocation2 + $0x8] sm:$0xf]
        %v936 = vcombine.high %v932, %v932
        %937 = vrot.lane.b32.xlu0 %v932, 96
        %v938 = vpop.permute.xlu0 %937
        %939 = vrot.lane.b32.xlu0 %v936, 96
        %v940 = vpop.permute.xlu0 %939
        %941 = vrot.lane.b32.xlu0 %v933, 96
        %v942 = vpop.permute.xlu0 %941
        %vm943 = vcmask 785408
        %v944 = vsel %vm943, %v938, %v940
        %v945 = vsel %vm943, %v940, %v942
        %v948 = vsel %vm341, %v944, 0.0
        %v949 = vsel %vm342, %v945, 0.0
        %s950 = scalar_lea.vmem %s3, 48
        %v951 = vld [vmem:[%s950] sm:$0xff]
        %v953 = vsel %vm206, %v951, 0
        %v956 = vsel %vm210, %v948, 0
        %v959 = vsel %vm210, %v949, 0
        %961 = vmatprep.subr.mxu0 %v959
        %962 = vmatpush1.msra.mxu0 %v956
        %963 = vmatprep.subr.mxu0 0.0
        %964 = vmatpush1.msra.mxu0 0.0
        %965 = vmatprep.subr.mxu0 0.0
        %966 = vmatpush1.msra.mxu0 0.0
        %967 = vmatprep.subr.mxu0 0.0
        %968 = vmatpush1.msra.mxu0 0.0
        %969 = vmatprep.subr.mxu0 0.0
        %970 = vmatpush1.msra.mxu0 0.0
        %971 = vmatprep.subr.mxu0 0.0
        %972 = vmatpush1.msra.mxu0 0.0
        %973 = vmatprep.subr.mxu0 0.0
        %974 = vmatpush1.msra.mxu0 0.0
        %975 = vmatprep.subr.mxu0 0.0
        %976 = vmatpush1.msra.mxu0 0.0
        %977 = vmatprep.subr.mxu0 0.0
        %978 = vmatpush1.msra.mxu0 0.0
        %979 = vmatprep.subr.mxu0 0.0
        %980 = vmatpush1.msra.mxu0 0.0
        %981 = vmatprep.subr.mxu0 0.0
        %982 = vmatpush1.msra.mxu0 0.0
        %983 = vmatprep.subr.mxu0 0.0
        %984 = vmatpush1.msra.mxu0 0.0
        %985 = vmatprep.subr.mxu0 0.0
        %986 = vmatpush1.msra.mxu0 0.0
        %987 = vmatprep.subr.mxu0 0.0
        %988 = vmatpush1.msra.mxu0 0.0
        %989 = vmatprep.subr.mxu0 0.0
        %990 = vmatpush1.msra.mxu0 0.0
        %991 = vmatprep.subr.mxu0 0.0
        %992 = vmatpush1.msra.mxu0 0.0
        %993 = vmatprep.subr.mxu0 0.0
        %994 = vmatpush1.msra.mxu0 0.0
        %995 = vmatprep.subr.mxu0 0.0
        %996 = vmatpush1.msra.mxu0 0.0
        %997 = vmatprep.subr.mxu0 0.0
        %998 = vmatpush1.msra.mxu0 0.0
        %999 = vmatprep.subr.mxu0 0.0
        %1000 = vmatpush1.msra.mxu0 0.0
        %1001 = vmatprep.subr.mxu0 0.0
        %1002 = vmatpush1.msra.mxu0 0.0
        %1003 = vmatprep.subr.mxu0 0.0
        %1004 = vmatpush1.msra.mxu0 0.0
        %1005 = vmatprep.subr.mxu0 0.0
        %1006 = vmatpush1.msra.mxu0 0.0
        %1007 = vmatprep.subr.mxu0 0.0
        %1008 = vmatpush1.msra.mxu0 0.0
        %1009 = vmatprep.subr.mxu0 0.0
        %1010 = vmatpush1.msra.mxu0 0.0
        %1011 = vmatprep.subr.mxu0 0.0
        %1012 = vmatpush1.msra.mxu0 0.0
        %1013 = vmatprep.subr.mxu0 0.0
        %1014 = vmatpush1.msra.mxu0 0.0
        %1015 = vmatprep.subr.mxu0 0.0
        %1016 = vmatpush1.msra.mxu0 0.0
        %1017 = vmatprep.subr.mxu0 0.0
        %1018 = vmatpush1.msra.mxu0 0.0
        %1019 = vmatprep.subr.mxu0 0.0
        %1020 = vmatpush1.msra.mxu0 0.0
        %1021 = vmatprep.subr.mxu0 0.0
        %1022 = vmatpush1.msra.mxu0 0.0
        %1023 = vmatprep.subr.mxu0 0.0
        %1024 = vmatpush1.msra.mxu0 0.0
        %1025 = vmatprep.mubr.f32.mxu0 0.0
        %1026 = vmatmul.mubr.f32.gmra.mrb[0].mxu0 %v953
        %v1027 = vpop.f32.mrb[0].mxu0
        %v1028 = vadd.f32 0.0, %v1027
        %v1029 = vpop.f32.mrb[0].mxu0
        %v1030 = vadd.f32 0.0, %v1029
        %1031 = vdwg.mxu0
        %v1032 = vadd.f32 %v930, %v1028
        %v1033 = vadd.f32 %v931, %v1030
        %v1034 = vld [vmem:[#allocation2] sm:$0xff]
        %v1035 = vld [vmem:[#allocation2 + $0x8] sm:$0xf]
        %s1036 = scalar_lea.vmem %s3, 56
        %v1037 = vld [vmem:[%s1036] sm:$0xff]
        %v1040 = vcombine.high %v1034, %v1034
        %1041 = vrot.lane.b32.xlu0 %v1034, 95
        %v1042 = vpop.permute.xlu0 %1041
        %1043 = vrot.lane.b32.xlu0 %v1040, 95
        %v1044 = vpop.permute.xlu0 %1043
        %1045 = vrot.lane.b32.xlu0 %v1035, 95
        %v1046 = vpop.permute.xlu0 %1045
        %vm1047 = vcmask 777216
        %v1048 = vsel %vm1047, %v1042, %v1044
        %v1049 = vsel %vm1047, %v1044, %v1046
        %v1051 = vsel %vm206, %v1037, 0
        %v1053 = vsel %vm210, %v1048, 0
        %v1055 = vsel %vm210, %v1049, 0
        %1057 = vmatprep.subr.mxu0 %v1055
        %1058 = vmatpush1.msra.mxu0 %v1053
        %1059 = vmatprep.subr.mxu0 0.0
        %1060 = vmatpush1.msra.mxu0 0.0
        %1061 = vmatprep.subr.mxu0 0.0
        %1062 = vmatpush1.msra.mxu0 0.0
        %1063 = vmatprep.subr.mxu0 0.0
        %1064 = vmatpush1.msra.mxu0 0.0
        %1065 = vmatprep.subr.mxu0 0.0
        %1066 = vmatpush1.msra.mxu0 0.0
        %1067 = vmatprep.subr.mxu0 0.0
        %1068 = vmatpush1.msra.mxu0 0.0
        %1069 = vmatprep.subr.mxu0 0.0
        %1070 = vmatpush1.msra.mxu0 0.0
        %1071 = vmatprep.subr.mxu0 0.0
        %1072 = vmatpush1.msra.mxu0 0.0
        %1073 = vmatprep.subr.mxu0 0.0
        %1074 = vmatpush1.msra.mxu0 0.0
        %1075 = vmatprep.subr.mxu0 0.0
        %1076 = vmatpush1.msra.mxu0 0.0
        %1077 = vmatprep.subr.mxu0 0.0
        %1078 = vmatpush1.msra.mxu0 0.0
        %1079 = vmatprep.subr.mxu0 0.0
        %1080 = vmatpush1.msra.mxu0 0.0
        %1081 = vmatprep.subr.mxu0 0.0
        %1082 = vmatpush1.msra.mxu0 0.0
        %1083 = vmatprep.subr.mxu0 0.0
        %1084 = vmatpush1.msra.mxu0 0.0
        %1085 = vmatprep.subr.mxu0 0.0
        %1086 = vmatpush1.msra.mxu0 0.0
        %1087 = vmatprep.subr.mxu0 0.0
        %1088 = vmatpush1.msra.mxu0 0.0
        %1089 = vmatprep.subr.mxu0 0.0
        %1090 = vmatpush1.msra.mxu0 0.0
        %1091 = vmatprep.subr.mxu0 0.0
        %1092 = vmatpush1.msra.mxu0 0.0
        %1093 = vmatprep.subr.mxu0 0.0
        %1094 = vmatpush1.msra.mxu0 0.0
        %1095 = vmatprep.subr.mxu0 0.0
        %1096 = vmatpush1.msra.mxu0 0.0
        %1097 = vmatprep.subr.mxu0 0.0
        %1098 = vmatpush1.msra.mxu0 0.0
        %1099 = vmatprep.subr.mxu0 0.0
        %1100 = vmatpush1.msra.mxu0 0.0
        %1101 = vmatprep.subr.mxu0 0.0
        %1102 = vmatpush1.msra.mxu0 0.0
        %1103 = vmatprep.subr.mxu0 0.0
        %1104 = vmatpush1.msra.mxu0 0.0
        %1105 = vmatprep.subr.mxu0 0.0
        %1106 = vmatpush1.msra.mxu0 0.0
        %1107 = vmatprep.subr.mxu0 0.0
        %1108 = vmatpush1.msra.mxu0 0.0
        %1109 = vmatprep.subr.mxu0 0.0
        %1110 = vmatpush1.msra.mxu0 0.0
        %1111 = vmatprep.subr.mxu0 0.0
        %1112 = vmatpush1.msra.mxu0 0.0
        %1113 = vmatprep.subr.mxu0 0.0
        %1114 = vmatpush1.msra.mxu0 0.0
        %1115 = vmatprep.subr.mxu0 0.0
        %1116 = vmatpush1.msra.mxu0 0.0
        %1117 = vmatprep.subr.mxu0 0.0
        %1118 = vmatpush1.msra.mxu0 0.0
        %1119 = vmatprep.subr.mxu0 0.0
        %1120 = vmatpush1.msra.mxu0 0.0
        %1121 = vmatprep.mubr.f32.mxu0 0.0
        %1122 = vmatmul.mubr.f32.gmra.mrb[0].mxu0 %v1051
        %v1123 = vpop.f32.mrb[0].mxu0
        %v1124 = vadd.f32 0.0, %v1123
        %v1125 = vpop.f32.mrb[0].mxu0
        %v1126 = vadd.f32 0.0, %v1125
        %1127 = vdwg.mxu0
        %v1128 = vadd.f32 %v1032, %v1124
        %v1129 = vadd.f32 %v1033, %v1126
        %v1130 = vld [vmem:[#allocation2] sm:$0xff]
        %v1131 = vld [vmem:[#allocation2 + $0x8] sm:$0xf]
        %v1134 = vcombine.high %v1130, %v1130
        %1135 = vrot.lane.b32.xlu0 %v1130, 94
        %v1136 = vpop.permute.xlu0 %1135
        %1137 = vrot.lane.b32.xlu0 %v1134, 94
        %v1138 = vpop.permute.xlu0 %1137
        %1139 = vrot.lane.b32.xlu0 %v1131, 94
        %v1140 = vpop.permute.xlu0 %1139
        %vm1141 = vcmask 769024
        %v1142 = vsel %vm1141, %v1136, %v1138
        %v1143 = vsel %vm1141, %v1138, %v1140
        %v1146 = vsel %vm530, %v1142, 0.0
        %v1147 = vsel %vm531, %v1143, 0.0
        %s1148 = scalar_lea.vmem %s3, 64
        %v1149 = vld [vmem:[%s1148] sm:$0xff]
        %v1151 = vsel %vm206, %v1149, 0
        %v1154 = vsel %vm210, %v1146, 0
        %v1157 = vsel %vm210, %v1147, 0
        %1159 = vmatprep.subr.mxu0 %v1157
        %1160 = vmatpush1.msra.mxu0 %v1154
        %1161 = vmatprep.subr.mxu0 0.0
        %1162 = vmatpush1.msra.mxu0 0.0
        %1163 = vmatprep.subr.mxu0 0.0
        %1164 = vmatpush1.msra.mxu0 0.0
        %1165 = vmatprep.subr.mxu0 0.0
        %1166 = vmatpush1.msra.mxu0 0.0
        %1167 = vmatprep.subr.mxu0 0.0
        %1168 = vmatpush1.msra.mxu0 0.0
        %1169 = vmatprep.subr.mxu0 0.0
        %1170 = vmatpush1.msra.mxu0 0.0
        %1171 = vmatprep.subr.mxu0 0.0
        %1172 = vmatpush1.msra.mxu0 0.0
        %1173 = vmatprep.subr.mxu0 0.0
        %1174 = vmatpush1.msra.mxu0 0.0
        %1175 = vmatprep.subr.mxu0 0.0
        %1176 = vmatpush1.msra.mxu0 0.0
        %1177 = vmatprep.subr.mxu0 0.0
        %1178 = vmatpush1.msra.mxu0 0.0
        %1179 = vmatprep.subr.mxu0 0.0
        %1180 = vmatpush1.msra.mxu0 0.0
        %1181 = vmatprep.subr.mxu0 0.0
        %1182 = vmatpush1.msra.mxu0 0.0
        %1183 = vmatprep.subr.mxu0 0.0
        %1184 = vmatpush1.msra.mxu0 0.0
        %1185 = vmatprep.subr.mxu0 0.0
        %1186 = vmatpush1.msra.mxu0 0.0
        %1187 = vmatprep.subr.mxu0 0.0
        %1188 = vmatpush1.msra.mxu0 0.0
        %1189 = vmatprep.subr.mxu0 0.0
        %1190 = vmatpush1.msra.mxu0 0.0
        %1191 = vmatprep.subr.mxu0 0.0
        %1192 = vmatpush1.msra.mxu0 0.0
        %1193 = vmatprep.subr.mxu0 0.0
        %1194 = vmatpush1.msra.mxu0 0.0
        %1195 = vmatprep.subr.mxu0 0.0
        %1196 = vmatpush1.msra.mxu0 0.0
        %1197 = vmatprep.subr.mxu0 0.0
        %1198 = vmatpush1.msra.mxu0 0.0
        %1199 = vmatprep.subr.mxu0 0.0
        %1200 = vmatpush1.msra.mxu0 0.0
        %1201 = vmatprep.subr.mxu0 0.0
        %1202 = vmatpush1.msra.mxu0 0.0
        %1203 = vmatprep.subr.mxu0 0.0
        %1204 = vmatpush1.msra.mxu0 0.0
        %1205 = vmatprep.subr.mxu0 0.0
        %1206 = vmatpush1.msra.mxu0 0.0
        %1207 = vmatprep.subr.mxu0 0.0
        %1208 = vmatpush1.msra.mxu0 0.0
        %1209 = vmatprep.subr.mxu0 0.0
        %1210 = vmatpush1.msra.mxu0 0.0
        %1211 = vmatprep.subr.mxu0 0.0
        %1212 = vmatpush1.msra.mxu0 0.0
        %1213 = vmatprep.subr.mxu0 0.0
        %1214 = vmatpush1.msra.mxu0 0.0
        %1215 = vmatprep.subr.mxu0 0.0
        %1216 = vmatpush1.msra.mxu0 0.0
        %1217 = vmatprep.subr.mxu0 0.0
        %1218 = vmatpush1.msra.mxu0 0.0
        %1219 = vmatprep.subr.mxu0 0.0
        %1220 = vmatpush1.msra.mxu0 0.0
        %1221 = vmatprep.subr.mxu0 0.0
        %1222 = vmatpush1.msra.mxu0 0.0
        %1223 = vmatprep.mubr.f32.mxu0 0.0
        %1224 = vmatmul.mubr.f32.gmra.mrb[0].mxu0 %v1151
        %v1225 = vpop.f32.mrb[0].mxu0
        %v1226 = vadd.f32 0.0, %v1225
        %v1227 = vpop.f32.mrb[0].mxu0
        %v1228 = vadd.f32 0.0, %v1227
        %1229 = vdwg.mxu0
        %v1230 = vadd.f32 %v1128, %v1226
        %v1231 = vadd.f32 %v1129, %v1228
        %1232 = vst [vmem:[%s190] sm:$0xff] %v1230
        %1233 = vst [vmem:[%s190 + $0x8] sm:$0xff] %v1231
        %s1234 = sand.u32 %s115, 1
        %s1235 = scalar_lea.sflag [#allocation4], %s1234
        %s1236 = sand.u32 %s115, 1
        %s1237 = smul.addr %s1236, 16
        %s1238 = scalar_lea.vmem [#allocation3], %s1237
        // Predicated region
        $region37: #{tpu_custom_call.1} parent=35 // pred_check
          %p1239 = pneg %p125
        $region38: #{tpu_custom_call.1} parent=35 // pred_check_branch
          %1241 = sbr.rel (%p1239) target = $region40
        $region39: #{tpu_custom_call.1} parent=35 // pred_region
          %s1243 = ssub.s32 256, 256
          %1244 = vsyncadd %s1235, %s1243
          %s1245 = smul.addr %s18, 2
          %s1246 = smul.addr %s1245, 128
          %s1247 = scalar_lea.hbm %s4, %s1246
          %s1249 = sshll.u32 %s1238, 4
          %s1250 = int_to_ptr.vmem [resolvable:$true] %s1249
          %1252 = dma.vmem_to_hbm [thread:$0]  %s1250, 256, %s1247, %s1235
        $region40: #{tpu_custom_call.1} parent=35 // pred_fallthru
          _
      $region36: #{tpu_custom_call.1} parent=5 // pred_fallthru
        _
      %p1253 = scmp.le.s32.totalorder 2, %s13
      // Predicated region
      $region41: #{tpu_custom_call.1} parent=5 // pred_check
        %p1254 = pneg %p1253
      $region42: #{tpu_custom_call.1} parent=5 // pred_check_branch
        %1256 = sbr.rel (%p1254) target = $region44
      $region43: #{tpu_custom_call.1} parent=5 // pred_region
        %s1257 = ssub.s32 %s13, 2
        // Predicated region
        $region45: #{tpu_custom_call.1} parent=43 // pred_check
          %p1258 = pneg %p131
        $region46: #{tpu_custom_call.1} parent=43 // pred_check_branch
          %1260 = sbr.rel (%p1258) target = $region48
        $region47: #{tpu_custom_call.1} parent=43 // pred_region
          %s1261 = sand.u32 %s116, 1
          %s1262 = scalar_lea.sflag [#allocation4], %s1261
          %s1263 = sand.u32 %s116, 1
          %s1264 = smul.addr %s1263, 16
          %s1265 = scalar_lea.vmem [#allocation3], %s1264
          %1266 = dma.done %s1262, 256
        $region48: #{tpu_custom_call.1} parent=43 // pred_fallthru
          _
      $region44: #{tpu_custom_call.1} parent=5 // pred_fallthru
        _
    $region6: #{tpu_custom_call.1} parent=1 // loop_footer
      %s17 = sadd.s32 1, %s13
    $region7: #{tpu_custom_call.1} parent=1 // loop_footer_branch
      %12 = sbr.rel target = $region3
    $region8: #{tpu_custom_call.1} parent=1 // loop_exit
      _
    %1267 = vsyncpa [#allocation4], 1
    %s1268 = scalar_lea.sflag [#allocation4], 1
    %1269 = vsyncpa %s1268, 1

</llo_original>
